<compile_context>
chip_gen: v5e
topology: v5e:2x2
jax: 0.10.0
libtpu: 0.0.40
codegen_flags: <defaults>
</compile_context>

<pallas_src>
import functools

import jax
import jax.numpy as jnp
from jax.experimental import pallas as pl
from jax.experimental.pallas import tpu as pltpu


# ----------------------------------------------------------------------------
# helpers
# ----------------------------------------------------------------------------
def _round_up(x, m):
    return ((x + m - 1) // m) * m


def _pad_gate_weight(w, H, Hp):
    """w: (4H, H) PyTorch LSTM layout -> transposed, per-gate zero-padded (Hp, 4*Hp)."""
    wt = jnp.transpose(w).reshape(H, 4, H)                  # (H, gate, H), gate-major
    wt = jnp.pad(wt, ((0, Hp - H), (0, 0), (0, Hp - H)))
    return wt.reshape(Hp, 4 * Hp)


def _pad_gate_bias(b, H, Hp):
    """b: (4H,) -> per-gate zero-padded (1, 4*Hp)."""
    return jnp.pad(b.reshape(4, H), ((0, 0), (0, Hp - H))).reshape(1, 4 * Hp)


def _default_time_block(T):
    """Generation-aware time block: bigger on 128 MiB VMEM parts (v5e/v6e) than v7x."""
    try:
        vmem = pltpu.get_tpu_info().vmem_capacity_bytes
    except Exception:  # no TPU info available -> conservative cap
        vmem = 64 << 20
    cap = 32 if vmem <= (64 << 20) else 64
    if T <= cap:
        return T
    # Prefer the largest divisor of T in [cap//2, cap] -> exact blocks, no tail mask.
    for d in range(cap, max(cap // 2, 1) - 1, -1):
        if T % d == 0:
            return d
    # Awkward / prime T: use a full-size block; the padded tail is masked in-kernel.
    return cap


def _vmem_limit_bytes(TT, BB, Hp, w_itemsize):
    f32 = 4
    x_blk = TT * BB * Hp * f32
    out_blk = TT * BB * Hp * f32
    state_blks = 4 * BB * Hp * f32                       # h0,c0 inputs + hN,cN outputs
    weights = 2 * Hp * 4 * Hp * w_itemsize + 4 * Hp * f32
    streams = 2 * (x_blk + out_blk + state_blks + weights)   # pipeline double-buffers
    scratch = TT * BB * 4 * Hp * f32 + 2 * BB * Hp * f32     # gx scratch + h/c carries
    need = streams + scratch
    # Modest headroom; floor at the 32 MiB scoped default, cap below v7x's 64 MiB.
    return int(max(32 << 20, min(need + (4 << 20), 56 << 20)))


def reshape_state(state):
    """2-layer (bidirectional-encoder) state -> 1 layer of width hidden_size."""
    h_state, c_state = state
    new_h = jnp.concatenate([h_state[:-1], h_state[1:]], axis=2)
    new_c = jnp.concatenate([c_state[:-1], c_state[1:]], axis=2)
    return (new_h, new_c)


# ----------------------------------------------------------------------------
# Pallas LSTM kernel.
#   grid = (batch_blocks ["parallel"], time_blocks ["arbitrary"])
#   per grid step: ONE (TT*BB,Hp)@(Hp,4Hp) input projection into a VMEM scratch,
#   then a bounded-unroll serial loop doing only h_{t-1}@W_hh^T per step.
# ----------------------------------------------------------------------------
def _make_lstm_kernel(TT, BB, Hp, T_real, T_pad):
    mask_tail = (T_pad != T_real)

    def kernel(x_ref, h0_ref, c0_ref, wih_ref, whh_ref, b_ref,
               out_ref, hN_ref, cN_ref, gx_sc, h_sc, c_sc):
        t = pl.program_id(1)

        @pl.when(t == 0)
        def _():
            h_sc[...] = h0_ref[...].astype(jnp.float32)
            c_sc[...] = c0_ref[...].astype(jnp.float32)

        wih = wih_ref[...]                       # (Hp, 4Hp) resident
        whh = whh_ref[...]                       # (Hp, 4Hp) resident

        # In-kernel input projection for the whole time block: one large MXU matmul
        # (M = TT*BB rows) instead of a gates_x HBM round-trip.  x is kept f32 in HBM
        # (layout-clean reshape); operands are cast to the MXU dtype here.
        x2d = x_ref[...].reshape(TT * BB, Hp).astype(wih.dtype)
        gx = jnp.dot(x2d, wih, preferred_element_type=jnp.float32)
        gx_sc[...] = gx.reshape(TT, BB, 4 * Hp) + b_ref[...]

        def step(s, carry):
            h_prev, c_prev = carry
            gates = gx_sc[s] + jnp.dot(h_prev.astype(whh.dtype), whh,
                                       preferred_element_type=jnp.float32)
            i_g = jax.nn.sigmoid(gates[:, 0 * Hp:1 * Hp])    # 128-lane aligned slices
            f_g = jax.nn.sigmoid(gates[:, 1 * Hp:2 * Hp])
            g_g = jnp.tanh(gates[:, 2 * Hp:3 * Hp])
            o_g = jax.nn.sigmoid(gates[:, 3 * Hp:4 * Hp])
            c_new = f_g * c_prev + i_g * g_g
            h_new = o_g * jnp.tanh(c_new)
            if mask_tail:
                # Padded tail timesteps (global index >= T_real) must not advance the
                # carry, so hN/cN remain exact.  Their out rows are sliced off anyway.
                valid = (t * TT + s) < T_real
                h_new = jnp.where(valid, h_new, h_prev)
                c_new = jnp.where(valid, c_new, c_prev)
            out_ref[s] = h_new.astype(out_ref.dtype)
            return h_new, c_new

        # Bounded unroll: keeps LLO scheduling visibility without vreg spills when
        # BB*4Hp grows at production sizes.
        h_fin, c_fin = jax.lax.fori_loop(0, TT, step, (h_sc[...], c_sc[...]),
                                         unroll=min(TT, 8))
        h_sc[...] = h_fin
        c_sc[...] = c_fin

        @pl.when(t == pl.num_programs(1) - 1)     # final state stored only once
        def _():
            hN_ref[...] = h_fin.astype(hN_ref.dtype)
            cN_ref[...] = c_fin.astype(cN_ref.dtype)

    return kernel


def _lstm_recurrence(x, h0, c0, wih_t, whh_t, bias, TT, BB, T_real, T_pad):
    _, Bp, Hp = x.shape
    nt, nb = T_pad // TT, Bp // BB

    kernel = _make_lstm_kernel(TT, BB, Hp, T_real, T_pad)

    grid_spec = pltpu.PrefetchScalarGridSpec(
        num_scalar_prefetch=0,
        grid=(nb, nt),
        in_specs=[
            pl.BlockSpec((TT, BB, Hp), lambda b, t: (t, b, 0)),       # x block
            pl.BlockSpec((BB, Hp), lambda b, t: (b, 0)),              # h0
            pl.BlockSpec((BB, Hp), lambda b, t: (b, 0)),              # c0
            # Resident weights (constant block index -> never re-fetched).
            # TODO(synk): on v7x at H=512, single-buffer these (pipeline_mode=
            # pl.Buffered(1)) to reclaim the duplicated weight buffer in VMEM.
            pl.BlockSpec((Hp, 4 * Hp), lambda b, t: (0, 0)),          # W_ih^T
            pl.BlockSpec((Hp, 4 * Hp), lambda b, t: (0, 0)),          # W_hh^T
            pl.BlockSpec((1, 4 * Hp), lambda b, t: (0, 0)),           # bias
        ],
        out_specs=[
            pl.BlockSpec((TT, BB, Hp), lambda b, t: (t, b, 0)),       # all hidden states
            pl.BlockSpec((BB, Hp), lambda b, t: (b, 0)),              # final h
            pl.BlockSpec((BB, Hp), lambda b, t: (b, 0)),              # final c
        ],
        scratch_shapes=[
            pltpu.VMEM((TT, BB, 4 * Hp), jnp.float32),                # per-block gates_x
            pltpu.VMEM((BB, Hp), jnp.float32),                        # h carry
            pltpu.VMEM((BB, Hp), jnp.float32),                        # c carry
        ],
    )

    return pl.pallas_call(
        kernel,
        grid_spec=grid_spec,
        out_shape=(
            jax.ShapeDtypeStruct((T_pad, Bp, Hp), jnp.float32),
            jax.ShapeDtypeStruct((Bp, Hp), jnp.float32),
            jax.ShapeDtypeStruct((Bp, Hp), jnp.float32),
        ),
        compiler_params=pltpu.CompilerParams(
            dimension_semantics=("parallel", "arbitrary"),   # batch-parallel, time-serial
            vmem_limit_bytes=_vmem_limit_bytes(TT, BB, Hp, whh_t.dtype.itemsize)),
    )(x, h0, c0, wih_t, whh_t, bias)


def lstm_pallas(x_tbh, h0, c0, w_ih, w_hh, b_ih, b_hh, *,
                matmul_dtype=jnp.float32, time_block=None, batch_block=None):
    """x_tbh: (T, B, H) time-major. Returns (out:(T,B,H), hN:(B,H), cN:(B,H))."""
    T, B, H = x_tbh.shape
    Bp = _round_up(B, 8)             # sublane alignment
    Hp = _round_up(H, 128)           # lane alignment -> lane-dense stores, aligned gates

    wih_t = _pad_gate_weight(w_ih, H, Hp).astype(matmul_dtype)        # (Hp, 4Hp)
    whh_t = _pad_gate_weight(w_hh, H, Hp).astype(matmul_dtype)        # (Hp, 4Hp)
    bias = _pad_gate_bias(b_ih + b_hh, H, Hp).astype(jnp.float32)     # (1, 4Hp)

    TT = _default_time_block(T) if time_block is None else int(time_block)
    T_pad = _round_up(T, TT)

    # One batch block by default.  Only split for v7x megacore when Bp//2 >= 8 and a
    # multiple of 8 (pad the batch to 16+ at the caller), otherwise masked stores and
    # extra grid steps cost more than the 2-TC overlap gains.
    BB = Bp if batch_block is None else int(batch_block)
    assert BB % 8 == 0 and Bp % BB == 0

    # x stays f32 in HBM (layout-clean reshape inside the kernel); padded timesteps,
    # batch rows and hidden columns are zero so the real region is exact.
    x_p = jnp.pad(x_tbh.astype(jnp.float32),
                  ((0, T_pad - T), (0, Bp - B), (0, Hp - H)))
    h0_p = jnp.pad(h0.astype(jnp.float32), ((0, Bp - B), (0, Hp - H)))
    c0_p = jnp.pad(c0.astype(jnp.float32), ((0, Bp - B), (0, Hp - H)))

    out_p, hN_p, cN_p = _lstm_recurrence(x_p, h0_p, c0_p, wih_t, whh_t, bias,
                                         TT, BB, T, T_pad)
    return out_p[:T, :B, :H], hN_p[:B, :H], cN_p[:B, :H]


# ----------------------------------------------------------------------------
# Decoder / Seq2Seq glue (embedding lookup, state reshape, tied-weight generator).
# ----------------------------------------------------------------------------
def decoder_forward(params, tgt, dec_state, matmul_dtype=jnp.float32):
    """Mirrors Decoder.forward with attn=None and dropout in eval mode (identity)."""
    h_state, c_state = dec_state
    if h_state.shape[0] == 2:            # bidirectional-encoder state -> single layer
        h_state, c_state = reshape_state((h_state, c_state))

    # Embedding lookup directly in time-major order -> no (B,T,H)<->(T,B,H) HBM
    # transpose of activations (only the tiny int `tgt` is transposed).
    emb_tbh = params["emb"][tgt.T]                     # (T, B, H)
    # dropout(p) in eval mode -> identity

    out_tbh, hN, cN = lstm_pallas(
        emb_tbh, h_state[0], c_state[0],
        params["w_ih"], params["w_hh"], params["b_ih"], params["b_hh"],
        matmul_dtype=matmul_dtype)

    # attn is None -> skip attention; trailing dropout -> identity
    return out_tbh, (hN[None], cN[None])


@functools.partial(jax.jit, static_argnames=("matmul_dtype",))
def seq2seq_forward(params, encoder_outputs, final_enc_state, src_lengths, tgt,
                    dec_hidden=None, matmul_dtype=jnp.float32):
    """Mirrors Seq2Seq.forward."""
    # TODO(synk): the Encoder submodule (pack_padded_sequence bidirectional LSTM) is
    # not defined in the provided spec; encoder_outputs / final_enc_state are taken
    # as precomputed inputs instead of being recomputed here.
    if dec_hidden is None:
        dec_hidden = final_enc_state

    out_tbh, dec_hidden = decoder_forward(params, tgt, dec_hidden,
                                          matmul_dtype=matmul_dtype)

    # generator: nn.Linear(H, V) with weight tied to the decoder embedding.
    # einsum emits logits directly as (B, T, V) -> no activation transpose needed.
    if jnp.dtype(matmul_dtype) == jnp.dtype(jnp.float32):
        logits = jnp.einsum("tbh,vh->btv", out_tbh, params["emb"],
                            precision=jax.lax.Precision.HIGHEST) + params["gen_b"]
    else:
        # Perf path: bf16 operands to the MXU (~3x vs f32/HIGHEST on the biggest GEMM).
        logits = jnp.einsum("tbh,vh->btv",
                            out_tbh.astype(matmul_dtype),
                            params["emb"].astype(matmul_dtype),
                            preferred_element_type=jnp.float32) + params["gen_b"]
    return logits, dec_hidden


def init_seq2seq_params(key, hidden_size, tgt_vocab_size, padding_idx):
    ks = jax.random.split(key, 6)
    H = hidden_size
    emb = jax.random.normal(ks[0], (tgt_vocab_size, H), jnp.float32)
    emb = emb.at[padding_idx].set(0.0)                 # nn.Embedding padding_idx row
    k = 1.0 / jnp.sqrt(H)
    w_ih = jax.random.uniform(ks[1], (4 * H, H), jnp.float32, -k, k)
    w_hh = jax.random.uniform(ks[2], (4 * H, H), jnp.float32, -k, k)
    b_ih = jax.random.uniform(ks[3], (4 * H,), jnp.float32, -k, k)
    b_hh = jax.random.uniform(ks[4], (4 * H,), jnp.float32, -k, k)
    gen_b = jax.random.uniform(ks[5], (tgt_vocab_size,), jnp.float32, -k, k)
    return dict(emb=emb, w_ih=w_ih, w_hh=w_hh, b_ih=b_ih, b_hh=b_hh, gen_b=gen_b)


# ----------------------------------------------------------------------------
# pure-JAX reference (lax.scan LSTM + tied-weight generator) for verification
# ----------------------------------------------------------------------------
def _lstm_scan_ref(x_tbh, h0, c0, w_ih, w_hh, b_ih, b_hh):
    H = h0.shape[1]

    def step(carry, x_t):
        h, c = carry
        gates = (jnp.dot(x_t, w_ih.T, precision=jax.lax.Precision.HIGHEST)
                 + jnp.dot(h, w_hh.T, precision=jax.lax.Precision.HIGHEST)
                 + b_ih + b_hh)
        i_g = jax.nn.sigmoid(gates[:, 0 * H:1 * H])
        f_g = jax.nn.sigmoid(gates[:, 1 * H:2 * H])
        g_g = jnp.tanh(gates[:, 2 * H:3 * H])
        o_g = jax.nn.sigmoid(gates[:, 3 * H:4 * H])
        c = f_g * c + i_g * g_g
        h = o_g * jnp.tanh(c)
        return (h, c), h

    (hN, cN), out = jax.lax.scan(step, (h0, c0), x_tbh)
    return out, hN, cN


def seq2seq_reference(params, final_enc_state, tgt):
    h_state, c_state = final_enc_state
    if h_state.shape[0] == 2:
        h_state, c_state = reshape_state((h_state, c_state))
    x = params["emb"][tgt.T]
    out, hN, cN = _lstm_scan_ref(x, h_state[0], c_state[0],
                                 params["w_ih"], params["w_hh"],
                                 params["b_ih"], params["b_hh"])
    logits = jnp.einsum("tbh,vh->btv", out, params["emb"],
                        precision=jax.lax.Precision.HIGHEST) + params["gen_b"]
    return logits, (hN[None], cN[None])


if __name__ == "__main__":
    B, T, H = 2, 8, 32
    VOCAB, PAD = 50, 0

    key = jax.random.PRNGKey(0)
    k_par, k_tgt, k_h, k_c, k_enc = jax.random.split(key, 5)

    params = init_seq2seq_params(k_par, H, VOCAB, PAD)

    tgt = jax.random.randint(k_tgt, (B, T), 0, VOCAB, dtype=jnp.int32)
    # encoder was a 1-layer bidirectional LSTM with hidden H//2 -> state (2, B, H//2)
    enc_h = jax.random.normal(k_h, (2, B, H // 2), jnp.float32)
    enc_c = jax.random.normal(k_c, (2, B, H // 2), jnp.float32)
    encoder_outputs = jax.random.normal(k_enc, (B, T, H), jnp.float32)
    src_lengths = jnp.full((B,), T, dtype=jnp.int32)

    ref_logits, (ref_h, ref_c) = seq2seq_reference(params, (enc_h, enc_c), tgt)

    # --- f32 MXU path: strict correctness check against the pure-JAX reference ---
    logits, (hN, cN) = seq2seq_forward(params, encoder_outputs, (enc_h, enc_c),
                                       src_lengths, tgt, matmul_dtype=jnp.float32)
    jax.block_until_ready((logits, hN, cN))
    assert logits.shape == (B, T, VOCAB)
    assert hN.shape == (1, B, H) and cN.shape == (1, B, H)
    assert jnp.allclose(logits, ref_logits, atol=1e-2, rtol=1e-2)
    assert jnp.allclose(hN, ref_h, atol=1e-2, rtol=1e-2)
    assert jnp.allclose(cN, ref_c, atol=1e-2, rtol=1e-2)

    # --- bf16 MXU path (perf configuration; carries/gate math stay f32): loose check
    logits_bf, (hN_bf, cN_bf) = seq2seq_forward(params, encoder_outputs,
                                                (enc_h, enc_c), src_lengths, tgt,
                                                matmul_dtype=jnp.bfloat16)
    jax.block_until_ready((logits_bf, hN_bf, cN_bf))
    assert bool(jnp.isfinite(logits_bf).all())
    assert jnp.allclose(logits_bf, ref_logits, atol=0.25, rtol=0.25)

    # --- padded-tail path: time_block that does not divide T (masked tail steps) ---
    x_tbh = params["emb"][tgt.T]
    h0 = jnp.concatenate([enc_h[0], enc_h[1]], axis=-1)
    c0 = jnp.concatenate([enc_c[0], enc_c[1]], axis=-1)
    out_pad, hP, cP = lstm_pallas(x_tbh, h0, c0, params["w_ih"], params["w_hh"],
                                  params["b_ih"], params["b_hh"],
                                  matmul_dtype=jnp.float32, time_block=3)
    ref_out, ref_hP, ref_cP = _lstm_scan_ref(x_tbh, h0, c0, params["w_ih"],
                                             params["w_hh"], params["b_ih"],
                                             params["b_hh"])
    jax.block_until_ready((out_pad, hP, cP))
    assert jnp.allclose(out_pad, ref_out, atol=1e-2, rtol=1e-2)
    assert jnp.allclose(hP, ref_hP, atol=1e-2, rtol=1e-2)
    assert jnp.allclose(cP, ref_cP, atol=1e-2, rtol=1e-2)

    print("KERNEL_OK")
</pallas_src>

<mosaic_0001>
module attributes {stable_mosaic.version = 11 : i64} {
  func.func @kernel(%arg0: i32, %arg1: i32, %arg2: memref<8x8x128xf32, #tpu.memory_space<vmem>>, %arg3: memref<8x128xf32, #tpu.memory_space<vmem>>, %arg4: memref<8x128xf32, #tpu.memory_space<vmem>>, %arg5: memref<128x512xf32, #tpu.memory_space<vmem>>, %arg6: memref<128x512xf32, #tpu.memory_space<vmem>>, %arg7: memref<1x512xf32, #tpu.memory_space<vmem>>, %arg8: memref<8x8x128xf32, #tpu.memory_space<vmem>>, %arg9: memref<8x128xf32, #tpu.memory_space<vmem>>, %arg10: memref<8x128xf32, #tpu.memory_space<vmem>>, %arg11: memref<8x8x512xf32, #tpu.memory_space<vmem>>, %arg12: memref<8x128xf32, #tpu.memory_space<vmem>>, %arg13: memref<8x128xf32, #tpu.memory_space<vmem>>) attributes {dimension_semantics = [#tpu.dimension_semantics<parallel>, #tpu.dimension_semantics<arbitrary>], iteration_bounds = array<i64: 1, 1>, scalar_prefetch = 0 : i64, scratch_operands = 3 : i64, tpu.core_type = #tpu.core_type<tc>, window_params = [{transform_indices = @transform_0, window_bounds = array<i64: 8, 8, 128>}, {transform_indices = @transform_1, window_bounds = array<i64: 8, 128>}, {transform_indices = @transform_2, window_bounds = array<i64: 8, 128>}, {pipeline_mode = #tpu.pipeline_mode<synchronous>, transform_indices = @transform_3, window_bounds = array<i64: 128, 512>}, {pipeline_mode = #tpu.pipeline_mode<synchronous>, transform_indices = @transform_4, window_bounds = array<i64: 128, 512>}, {pipeline_mode = #tpu.pipeline_mode<synchronous>, transform_indices = @transform_5, window_bounds = array<i64: 1, 512>}, {transform_indices = @transform_6, window_bounds = array<i64: 8, 8, 128>}, {transform_indices = @transform_7, window_bounds = array<i64: 8, 128>}, {transform_indices = @transform_8, window_bounds = array<i64: 8, 128>}]} {
    %c0_i32 = arith.constant 0 : i32
    %0 = arith.cmpi eq, %arg1, %c0_i32 : i32
    %1 = arith.extui %0 : i1 to i32
    %c0_i32_0 = arith.constant 0 : i32
    %2 = arith.cmpi ne, %1, %c0_i32_0 : i32
    scf.if %2 {
      %c0_87 = arith.constant 0 : index
      %c0_88 = arith.constant 0 : index
      %293 = vector.load %arg3[%c0_87, %c0_88] : memref<8x128xf32, #tpu.memory_space<vmem>>, vector<8x128xf32>
      %c0_89 = arith.constant 0 : index
      %c0_90 = arith.constant 0 : index
      %294 = vector.load %arg12[%c0_89, %c0_90] : memref<8x128xf32, #tpu.memory_space<vmem>>, vector<8x128xf32>
      tpu.vector_store %arg12[%c0_89, %c0_90], %293 {strides = array<i32>} : memref<8x128xf32, #tpu.memory_space<vmem>>, vector<8x128xf32>,
      %c0_91 = arith.constant 0 : index
      %c0_92 = arith.constant 0 : index
      %295 = vector.load %arg4[%c0_91, %c0_92] : memref<8x128xf32, #tpu.memory_space<vmem>>, vector<8x128xf32>
      %c0_93 = arith.constant 0 : index
      %c0_94 = arith.constant 0 : index
      %296 = vector.load %arg13[%c0_93, %c0_94] : memref<8x128xf32, #tpu.memory_space<vmem>>, vector<8x128xf32>
      tpu.vector_store %arg13[%c0_93, %c0_94], %295 {strides = array<i32>} : memref<8x128xf32, #tpu.memory_space<vmem>>, vector<8x128xf32>,
    } else {
    }
    %c0 = arith.constant 0 : index
    %c0_1 = arith.constant 0 : index
    %3 = vector.load %arg5[%c0, %c0_1] : memref<128x512xf32, #tpu.memory_space<vmem>>, vector<128x512xf32>
    %c0_2 = arith.constant 0 : index
    %c0_3 = arith.constant 0 : index
    %4 = vector.load %arg6[%c0_2, %c0_3] : memref<128x512xf32, #tpu.memory_space<vmem>>, vector<128x512xf32>
    %c0_4 = arith.constant 0 : index
    %c0_5 = arith.constant 0 : index
    %c0_6 = arith.constant 0 : index
    %5 = vector.load %arg2[%c0_4, %c0_5, %c0_6] : memref<8x8x128xf32, #tpu.memory_space<vmem>>, vector<8x8x128xf32>
    %6 = vector.shape_cast %5 : vector<8x8x128xf32> to vector<64x128xf32>
    %cst = arith.constant dense<0.000000e+00> : vector<64x512xf32>
    %7 = tpu.matmul %6, %3, %cst {dimension_numbers = #tpu.dot_dimension_numbers<[1], [0], [0], [1], [0, 0, 1, 1], [], []>} : vector<64x128xf32>, vector<128x512xf32>, vector<64x512xf32> -> vector<64x512xf32>
    %8 = vector.shape_cast %7 : vector<64x512xf32> to vector<8x8x512xf32>
    %c0_7 = arith.constant 0 : index
    %c0_8 = arith.constant 0 : index
    %9 = vector.load %arg7[%c0_7, %c0_8] : memref<1x512xf32, #tpu.memory_space<vmem>>, vector<1x512xf32>
    %10 = vector.shape_cast %9 : vector<1x512xf32> to vector<1x1x512xf32>
    %11 = vector.broadcast %10 : vector<1x1x512xf32> to vector<8x8x512xf32>
    %12 = arith.addf %8, %11 : vector<8x8x512xf32>
    %c0_9 = arith.constant 0 : index
    %c0_10 = arith.constant 0 : index
    %c0_11 = arith.constant 0 : index
    %13 = vector.load %arg11[%c0_9, %c0_10, %c0_11] : memref<8x8x512xf32, #tpu.memory_space<vmem>>, vector<8x8x512xf32>
    tpu.vector_store %arg11[%c0_9, %c0_10, %c0_11], %12 {strides = array<i32>} : memref<8x8x512xf32, #tpu.memory_space<vmem>>, vector<8x8x512xf32>,
    %c0_12 = arith.constant 0 : index
    %c0_13 = arith.constant 0 : index
    %14 = vector.load %arg12[%c0_12, %c0_13] : memref<8x128xf32, #tpu.memory_space<vmem>>, vector<8x128xf32>
    %c0_14 = arith.constant 0 : index
    %c0_15 = arith.constant 0 : index
    %15 = vector.load %arg13[%c0_14, %c0_15] : memref<8x128xf32, #tpu.memory_space<vmem>>, vector<8x128xf32>
    %c0_i32_16 = arith.constant 0 : i32
    %16 = arith.index_cast %c0_i32_16 : i32 to index
    %c0_17 = arith.constant 0 : index
    %c0_18 = arith.constant 0 : index
    %17 = vector.load %arg11[%16, %c0_17, %c0_18] : memref<8x8x512xf32, #tpu.memory_space<vmem>>, vector<1x8x512xf32>
    %18 = vector.shape_cast %17 : vector<1x8x512xf32> to vector<8x512xf32>
    %cst_19 = arith.constant dense<0.000000e+00> : vector<8x512xf32>
    %19 = tpu.matmul %14, %4, %cst_19 {dimension_numbers = #tpu.dot_dimension_numbers<[1], [0], [0], [1], [0, 0, 1, 1], [], []>} : vector<8x128xf32>, vector<128x512xf32>, vector<8x512xf32> -> vector<8x512xf32>
    %20 = arith.addf %18, %19 : vector<8x512xf32>
    %21 = vector.extract_strided_slice %20 {offsets = [0, 0], sizes = [8, 128], strides = [1, 1]} : vector<8x512xf32> to vector<8x128xf32>
    %22 = arith.negf %21 : vector<8x128xf32>
    %23 = math.exp %22 : vector<8x128xf32>
    %cst_20 = arith.constant 1.000000e+00 : f32
    %24 = vector.broadcast %cst_20 : f32 to vector<8x128xf32>
    %25 = arith.addf %24, %23 : vector<8x128xf32>
    %26 = arith.divf %24, %25 : vector<8x128xf32>
    %27 = vector.extract_strided_slice %20 {offsets = [0, 128], sizes = [8, 128], strides = [1, 1]} : vector<8x512xf32> to vector<8x128xf32>
    %28 = arith.negf %27 : vector<8x128xf32>
    %29 = math.exp %28 : vector<8x128xf32>
    %cst_21 = arith.constant 1.000000e+00 : f32
    %30 = vector.broadcast %cst_21 : f32 to vector<8x128xf32>
    %31 = arith.addf %30, %29 : vector<8x128xf32>
    %32 = arith.divf %30, %31 : vector<8x128xf32>
    %33 = vector.extract_strided_slice %20 {offsets = [0, 256], sizes = [8, 128], strides = [1, 1]} : vector<8x512xf32> to vector<8x128xf32>
    %34 = math.tanh %33 : vector<8x128xf32>
    %35 = vector.extract_strided_slice %20 {offsets = [0, 384], sizes = [8, 128], strides = [1, 1]} : vector<8x512xf32> to vector<8x128xf32>
    %36 = arith.negf %35 : vector<8x128xf32>
    %37 = math.exp %36 : vector<8x128xf32>
    %cst_22 = arith.constant 1.000000e+00 : f32
    %38 = vector.broadcast %cst_22 : f32 to vector<8x128xf32>
    %39 = arith.addf %38, %37 : vector<8x128xf32>
    %40 = arith.divf %38, %39 : vector<8x128xf32>
    %41 = arith.mulf %32, %15 : vector<8x128xf32>
    %42 = arith.mulf %26, %34 : vector<8x128xf32>
    %43 = arith.addf %41, %42 : vector<8x128xf32>
    %44 = math.tanh %43 : vector<8x128xf32>
    %45 = arith.mulf %40, %44 : vector<8x128xf32>
    %46 = arith.index_cast %c0_i32_16 : i32 to index
    %c0_23 = arith.constant 0 : index
    %c0_24 = arith.constant 0 : index
    %47 = vector.load %arg8[%46, %c0_23, %c0_24] : memref<8x8x128xf32, #tpu.memory_space<vmem>>, vector<1x8x128xf32>
    %48 = vector.shape_cast %47 : vector<1x8x128xf32> to vector<8x128xf32>
    %49 = vector.shape_cast %45 : vector<8x128xf32> to vector<1x8x128xf32>
    tpu.vector_store %arg8[%46, %c0_23, %c0_24], %49 {strides = array<i32>} : memref<8x8x128xf32, #tpu.memory_space<vmem>>, vector<1x8x128xf32>,
    %c1_i32 = arith.constant 1 : i32
    %50 = arith.index_cast %c1_i32 : i32 to index
    %c0_25 = arith.constant 0 : index
    %c0_26 = arith.constant 0 : index
    %51 = vector.load %arg11[%50, %c0_25, %c0_26] : memref<8x8x512xf32, #tpu.memory_space<vmem>>, vector<1x8x512xf32>
    %52 = vector.shape_cast %51 : vector<1x8x512xf32> to vector<8x512xf32>
    %cst_27 = arith.constant dense<0.000000e+00> : vector<8x512xf32>
    %53 = tpu.matmul %45, %4, %cst_27 {dimension_numbers = #tpu.dot_dimension_numbers<[1], [0], [0], [1], [0, 0, 1, 1], [], []>} : vector<8x128xf32>, vector<128x512xf32>, vector<8x512xf32> -> vector<8x512xf32>
    %54 = arith.addf %52, %53 : vector<8x512xf32>
    %55 = vector.extract_strided_slice %54 {offsets = [0, 0], sizes = [8, 128], strides = [1, 1]} : vector<8x512xf32> to vector<8x128xf32>
    %56 = arith.negf %55 : vector<8x128xf32>
    %57 = math.exp %56 : vector<8x128xf32>
    %cst_28 = arith.constant 1.000000e+00 : f32
    %58 = vector.broadcast %cst_28 : f32 to vector<8x128xf32>
    %59 = arith.addf %58, %57 : vector<8x128xf32>
    %60 = arith.divf %58, %59 : vector<8x128xf32>
    %61 = vector.extract_strided_slice %54 {offsets = [0, 128], sizes = [8, 128], strides = [1, 1]} : vector<8x512xf32> to vector<8x128xf32>
    %62 = arith.negf %61 : vector<8x128xf32>
    %63 = math.exp %62 : vector<8x128xf32>
    %cst_29 = arith.constant 1.000000e+00 : f32
    %64 = vector.broadcast %cst_29 : f32 to vector<8x128xf32>
    %65 = arith.addf %64, %63 : vector<8x128xf32>
    %66 = arith.divf %64, %65 : vector<8x128xf32>
    %67 = vector.extract_strided_slice %54 {offsets = [0, 256], sizes = [8, 128], strides = [1, 1]} : vector<8x512xf32> to vector<8x128xf32>
    %68 = math.tanh %67 : vector<8x128xf32>
    %69 = vector.extract_strided_slice %54 {offsets = [0, 384], sizes = [8, 128], strides = [1, 1]} : vector<8x512xf32> to vector<8x128xf32>
    %70 = arith.negf %69 : vector<8x128xf32>
    %71 = math.exp %70 : vector<8x128xf32>
    %cst_30 = arith.constant 1.000000e+00 : f32
    %72 = vector.broadcast %cst_30 : f32 to vector<8x128xf32>
    %73 = arith.addf %72, %71 : vector<8x128xf32>
    %74 = arith.divf %72, %73 : vector<8x128xf32>
    %75 = arith.mulf %66, %43 : vector<8x128xf32>
    %76 = arith.mulf %60, %68 : vector<8x128xf32>
    %77 = arith.addf %75, %76 : vector<8x128xf32>
    %78 = math.tanh %77 : vector<8x128xf32>
    %79 = arith.mulf %74, %78 : vector<8x128xf32>
    %80 = arith.index_cast %c1_i32 : i32 to index
    %c0_31 = arith.constant 0 : index
    %c0_32 = arith.constant 0 : index
    %81 = vector.load %arg8[%80, %c0_31, %c0_32] : memref<8x8x128xf32, #tpu.memory_space<vmem>>, vector<1x8x128xf32>
    %82 = vector.shape_cast %81 : vector<1x8x128xf32> to vector<8x128xf32>
    %83 = vector.shape_cast %79 : vector<8x128xf32> to vector<1x8x128xf32>
    tpu.vector_store %arg8[%80, %c0_31, %c0_32], %83 {strides = array<i32>} : memref<8x8x128xf32, #tpu.memory_space<vmem>>, vector<1x8x128xf32>,
    %c2_i32 = arith.constant 2 : i32
    %84 = arith.index_cast %c2_i32 : i32 to index
    %c0_33 = arith.constant 0 : index
    %c0_34 = arith.constant 0 : index
    %85 = vector.load %arg11[%84, %c0_33, %c0_34] : memref<8x8x512xf32, #tpu.memory_space<vmem>>, vector<1x8x512xf32>
    %86 = vector.shape_cast %85 : vector<1x8x512xf32> to vector<8x512xf32>
    %cst_35 = arith.constant dense<0.000000e+00> : vector<8x512xf32>
    %87 = tpu.matmul %79, %4, %cst_35 {dimension_numbers = #tpu.dot_dimension_numbers<[1], [0], [0], [1], [0, 0, 1, 1], [], []>} : vector<8x128xf32>, vector<128x512xf32>, vector<8x512xf32> -> vector<8x512xf32>
    %88 = arith.addf %86, %87 : vector<8x512xf32>
    %89 = vector.extract_strided_slice %88 {offsets = [0, 0], sizes = [8, 128], strides = [1, 1]} : vector<8x512xf32> to vector<8x128xf32>
    %90 = arith.negf %89 : vector<8x128xf32>
    %91 = math.exp %90 : vector<8x128xf32>
    %cst_36 = arith.constant 1.000000e+00 : f32
    %92 = vector.broadcast %cst_36 : f32 to vector<8x128xf32>
    %93 = arith.addf %92, %91 : vector<8x128xf32>
    %94 = arith.divf %92, %93 : vector<8x128xf32>
    %95 = vector.extract_strided_slice %88 {offsets = [0, 128], sizes = [8, 128], strides = [1, 1]} : vector<8x512xf32> to vector<8x128xf32>
    %96 = arith.negf %95 : vector<8x128xf32>
    %97 = math.exp %96 : vector<8x128xf32>
    %cst_37 = arith.constant 1.000000e+00 : f32
    %98 = vector.broadcast %cst_37 : f32 to vector<8x128xf32>
    %99 = arith.addf %98, %97 : vector<8x128xf32>
    %100 = arith.divf %98, %99 : vector<8x128xf32>
    %101 = vector.extract_strided_slice %88 {offsets = [0, 256], sizes = [8, 128], strides = [1, 1]} : vector<8x512xf32> to vector<8x128xf32>
    %102 = math.tanh %101 : vector<8x128xf32>
    %103 = vector.extract_strided_slice %88 {offsets = [0, 384], sizes = [8, 128], strides = [1, 1]} : vector<8x512xf32> to vector<8x128xf32>
    %104 = arith.negf %103 : vector<8x128xf32>
    %105 = math.exp %104 : vector<8x128xf32>
    %cst_38 = arith.constant 1.000000e+00 : f32
    %106 = vector.broadcast %cst_38 : f32 to vector<8x128xf32>
    %107 = arith.addf %106, %105 : vector<8x128xf32>
    %108 = arith.divf %106, %107 : vector<8x128xf32>
    %109 = arith.mulf %100, %77 : vector<8x128xf32>
    %110 = arith.mulf %94, %102 : vector<8x128xf32>
    %111 = arith.addf %109, %110 : vector<8x128xf32>
    %112 = math.tanh %111 : vector<8x128xf32>
    %113 = arith.mulf %108, %112 : vector<8x128xf32>
    %114 = arith.index_cast %c2_i32 : i32 to index
    %c0_39 = arith.constant 0 : index
    %c0_40 = arith.constant 0 : index
    %115 = vector.load %arg8[%114, %c0_39, %c0_40] : memref<8x8x128xf32, #tpu.memory_space<vmem>>, vector<1x8x128xf32>
    %116 = vector.shape_cast %115 : vector<1x8x128xf32> to vector<8x128xf32>
    %117 = vector.shape_cast %113 : vector<8x128xf32> to vector<1x8x128xf32>
    tpu.vector_store %arg8[%114, %c0_39, %c0_40], %117 {strides = array<i32>} : memref<8x8x128xf32, #tpu.memory_space<vmem>>, vector<1x8x128xf32>,
    %c3_i32 = arith.constant 3 : i32
    %118 = arith.index_cast %c3_i32 : i32 to index
    %c0_41 = arith.constant 0 : index
    %c0_42 = arith.constant 0 : index
    %119 = vector.load %arg11[%118, %c0_41, %c0_42] : memref<8x8x512xf32, #tpu.memory_space<vmem>>, vector<1x8x512xf32>
    %120 = vector.shape_cast %119 : vector<1x8x512xf32> to vector<8x512xf32>
    %cst_43 = arith.constant dense<0.000000e+00> : vector<8x512xf32>
    %121 = tpu.matmul %113, %4, %cst_43 {dimension_numbers = #tpu.dot_dimension_numbers<[1], [0], [0], [1], [0, 0, 1, 1], [], []>} : vector<8x128xf32>, vector<128x512xf32>, vector<8x512xf32> -> vector<8x512xf32>
    %122 = arith.addf %120, %121 : vector<8x512xf32>
    %123 = vector.extract_strided_slice %122 {offsets = [0, 0], sizes = [8, 128], strides = [1, 1]} : vector<8x512xf32> to vector<8x128xf32>
    %124 = arith.negf %123 : vector<8x128xf32>
    %125 = math.exp %124 : vector<8x128xf32>
    %cst_44 = arith.constant 1.000000e+00 : f32
    %126 = vector.broadcast %cst_44 : f32 to vector<8x128xf32>
    %127 = arith.addf %126, %125 : vector<8x128xf32>
    %128 = arith.divf %126, %127 : vector<8x128xf32>
    %129 = vector.extract_strided_slice %122 {offsets = [0, 128], sizes = [8, 128], strides = [1, 1]} : vector<8x512xf32> to vector<8x128xf32>
    %130 = arith.negf %129 : vector<8x128xf32>
    %131 = math.exp %130 : vector<8x128xf32>
    %cst_45 = arith.constant 1.000000e+00 : f32
    %132 = vector.broadcast %cst_45 : f32 to vector<8x128xf32>
    %133 = arith.addf %132, %131 : vector<8x128xf32>
    %134 = arith.divf %132, %133 : vector<8x128xf32>
    %135 = vector.extract_strided_slice %122 {offsets = [0, 256], sizes = [8, 128], strides = [1, 1]} : vector<8x512xf32> to vector<8x128xf32>
    %136 = math.tanh %135 : vector<8x128xf32>
    %137 = vector.extract_strided_slice %122 {offsets = [0, 384], sizes = [8, 128], strides = [1, 1]} : vector<8x512xf32> to vector<8x128xf32>
    %138 = arith.negf %137 : vector<8x128xf32>
    %139 = math.exp %138 : vector<8x128xf32>
    %cst_46 = arith.constant 1.000000e+00 : f32
    %140 = vector.broadcast %cst_46 : f32 to vector<8x128xf32>
    %141 = arith.addf %140, %139 : vector<8x128xf32>
    %142 = arith.divf %140, %141 : vector<8x128xf32>
    %143 = arith.mulf %134, %111 : vector<8x128xf32>
    %144 = arith.mulf %128, %136 : vector<8x128xf32>
    %145 = arith.addf %143, %144 : vector<8x128xf32>
    %146 = math.tanh %145 : vector<8x128xf32>
    %147 = arith.mulf %142, %146 : vector<8x128xf32>
    %148 = arith.index_cast %c3_i32 : i32 to index
    %c0_47 = arith.constant 0 : index
    %c0_48 = arith.constant 0 : index
    %149 = vector.load %arg8[%148, %c0_47, %c0_48] : memref<8x8x128xf32, #tpu.memory_space<vmem>>, vector<1x8x128xf32>
    %150 = vector.shape_cast %149 : vector<1x8x128xf32> to vector<8x128xf32>
    %151 = vector.shape_cast %147 : vector<8x128xf32> to vector<1x8x128xf32>
    tpu.vector_store %arg8[%148, %c0_47, %c0_48], %151 {strides = array<i32>} : memref<8x8x128xf32, #tpu.memory_space<vmem>>, vector<1x8x128xf32>,
    %c4_i32 = arith.constant 4 : i32
    %152 = arith.index_cast %c4_i32 : i32 to index
    %c0_49 = arith.constant 0 : index
    %c0_50 = arith.constant 0 : index
    %153 = vector.load %arg11[%152, %c0_49, %c0_50] : memref<8x8x512xf32, #tpu.memory_space<vmem>>, vector<1x8x512xf32>
    %154 = vector.shape_cast %153 : vector<1x8x512xf32> to vector<8x512xf32>
    %cst_51 = arith.constant dense<0.000000e+00> : vector<8x512xf32>
    %155 = tpu.matmul %147, %4, %cst_51 {dimension_numbers = #tpu.dot_dimension_numbers<[1], [0], [0], [1], [0, 0, 1, 1], [], []>} : vector<8x128xf32>, vector<128x512xf32>, vector<8x512xf32> -> vector<8x512xf32>
    %156 = arith.addf %154, %155 : vector<8x512xf32>
    %157 = vector.extract_strided_slice %156 {offsets = [0, 0], sizes = [8, 128], strides = [1, 1]} : vector<8x512xf32> to vector<8x128xf32>
    %158 = arith.negf %157 : vector<8x128xf32>
    %159 = math.exp %158 : vector<8x128xf32>
    %cst_52 = arith.constant 1.000000e+00 : f32
    %160 = vector.broadcast %cst_52 : f32 to vector<8x128xf32>
    %161 = arith.addf %160, %159 : vector<8x128xf32>
    %162 = arith.divf %160, %161 : vector<8x128xf32>
    %163 = vector.extract_strided_slice %156 {offsets = [0, 128], sizes = [8, 128], strides = [1, 1]} : vector<8x512xf32> to vector<8x128xf32>
    %164 = arith.negf %163 : vector<8x128xf32>
    %165 = math.exp %164 : vector<8x128xf32>
    %cst_53 = arith.constant 1.000000e+00 : f32
    %166 = vector.broadcast %cst_53 : f32 to vector<8x128xf32>
    %167 = arith.addf %166, %165 : vector<8x128xf32>
    %168 = arith.divf %166, %167 : vector<8x128xf32>
    %169 = vector.extract_strided_slice %156 {offsets = [0, 256], sizes = [8, 128], strides = [1, 1]} : vector<8x512xf32> to vector<8x128xf32>
    %170 = math.tanh %169 : vector<8x128xf32>
    %171 = vector.extract_strided_slice %156 {offsets = [0, 384], sizes = [8, 128], strides = [1, 1]} : vector<8x512xf32> to vector<8x128xf32>
    %172 = arith.negf %171 : vector<8x128xf32>
    %173 = math.exp %172 : vector<8x128xf32>
    %cst_54 = arith.constant 1.000000e+00 : f32
    %174 = vector.broadcast %cst_54 : f32 to vector<8x128xf32>
    %175 = arith.addf %174, %173 : vector<8x128xf32>
    %176 = arith.divf %174, %175 : vector<8x128xf32>
    %177 = arith.mulf %168, %145 : vector<8x128xf32>
    %178 = arith.mulf %162, %170 : vector<8x128xf32>
    %179 = arith.addf %177, %178 : vector<8x128xf32>
    %180 = math.tanh %179 : vector<8x128xf32>
    %181 = arith.mulf %176, %180 : vector<8x128xf32>
    %182 = arith.index_cast %c4_i32 : i32 to index
    %c0_55 = arith.constant 0 : index
    %c0_56 = arith.constant 0 : index
    %183 = vector.load %arg8[%182, %c0_55, %c0_56] : memref<8x8x128xf32, #tpu.memory_space<vmem>>, vector<1x8x128xf32>
    %184 = vector.shape_cast %183 : vector<1x8x128xf32> to vector<8x128xf32>
    %185 = vector.shape_cast %181 : vector<8x128xf32> to vector<1x8x128xf32>
    tpu.vector_store %arg8[%182, %c0_55, %c0_56], %185 {strides = array<i32>} : memref<8x8x128xf32, #tpu.memory_space<vmem>>, vector<1x8x128xf32>,
    %c5_i32 = arith.constant 5 : i32
    %186 = arith.index_cast %c5_i32 : i32 to index
    %c0_57 = arith.constant 0 : index
    %c0_58 = arith.constant 0 : index
    %187 = vector.load %arg11[%186, %c0_57, %c0_58] : memref<8x8x512xf32, #tpu.memory_space<vmem>>, vector<1x8x512xf32>
    %188 = vector.shape_cast %187 : vector<1x8x512xf32> to vector<8x512xf32>
    %cst_59 = arith.constant dense<0.000000e+00> : vector<8x512xf32>
    %189 = tpu.matmul %181, %4, %cst_59 {dimension_numbers = #tpu.dot_dimension_numbers<[1], [0], [0], [1], [0, 0, 1, 1], [], []>} : vector<8x128xf32>, vector<128x512xf32>, vector<8x512xf32> -> vector<8x512xf32>
    %190 = arith.addf %188, %189 : vector<8x512xf32>
    %191 = vector.extract_strided_slice %190 {offsets = [0, 0], sizes = [8, 128], strides = [1, 1]} : vector<8x512xf32> to vector<8x128xf32>
    %192 = arith.negf %191 : vector<8x128xf32>
    %193 = math.exp %192 : vector<8x128xf32>
    %cst_60 = arith.constant 1.000000e+00 : f32
    %194 = vector.broadcast %cst_60 : f32 to vector<8x128xf32>
    %195 = arith.addf %194, %193 : vector<8x128xf32>
    %196 = arith.divf %194, %195 : vector<8x128xf32>
    %197 = vector.extract_strided_slice %190 {offsets = [0, 128], sizes = [8, 128], strides = [1, 1]} : vector<8x512xf32> to vector<8x128xf32>
    %198 = arith.negf %197 : vector<8x128xf32>
    %199 = math.exp %198 : vector<8x128xf32>
    %cst_61 = arith.constant 1.000000e+00 : f32
    %200 = vector.broadcast %cst_61 : f32 to vector<8x128xf32>
    %201 = arith.addf %200, %199 : vector<8x128xf32>
    %202 = arith.divf %200, %201 : vector<8x128xf32>
    %203 = vector.extract_strided_slice %190 {offsets = [0, 256], sizes = [8, 128], strides = [1, 1]} : vector<8x512xf32> to vector<8x128xf32>
    %204 = math.tanh %203 : vector<8x128xf32>
    %205 = vector.extract_strided_slice %190 {offsets = [0, 384], sizes = [8, 128], strides = [1, 1]} : vector<8x512xf32> to vector<8x128xf32>
    %206 = arith.negf %205 : vector<8x128xf32>
    %207 = math.exp %206 : vector<8x128xf32>
    %cst_62 = arith.constant 1.000000e+00 : f32
    %208 = vector.broadcast %cst_62 : f32 to vector<8x128xf32>
    %209 = arith.addf %208, %207 : vector<8x128xf32>
    %210 = arith.divf %208, %209 : vector<8x128xf32>
    %211 = arith.mulf %202, %179 : vector<8x128xf32>
    %212 = arith.mulf %196, %204 : vector<8x128xf32>
    %213 = arith.addf %211, %212 : vector<8x128xf32>
    %214 = math.tanh %213 : vector<8x128xf32>
    %215 = arith.mulf %210, %214 : vector<8x128xf32>
    %216 = arith.index_cast %c5_i32 : i32 to index
    %c0_63 = arith.constant 0 : index
    %c0_64 = arith.constant 0 : index
    %217 = vector.load %arg8[%216, %c0_63, %c0_64] : memref<8x8x128xf32, #tpu.memory_space<vmem>>, vector<1x8x128xf32>
    %218 = vector.shape_cast %217 : vector<1x8x128xf32> to vector<8x128xf32>
    %219 = vector.shape_cast %215 : vector<8x128xf32> to vector<1x8x128xf32>
    tpu.vector_store %arg8[%216, %c0_63, %c0_64], %219 {strides = array<i32>} : memref<8x8x128xf32, #tpu.memory_space<vmem>>, vector<1x8x128xf32>,
    %c6_i32 = arith.constant 6 : i32
    %220 = arith.index_cast %c6_i32 : i32 to index
    %c0_65 = arith.constant 0 : index
    %c0_66 = arith.constant 0 : index
    %221 = vector.load %arg11[%220, %c0_65, %c0_66] : memref<8x8x512xf32, #tpu.memory_space<vmem>>, vector<1x8x512xf32>
    %222 = vector.shape_cast %221 : vector<1x8x512xf32> to vector<8x512xf32>
    %cst_67 = arith.constant dense<0.000000e+00> : vector<8x512xf32>
    %223 = tpu.matmul %215, %4, %cst_67 {dimension_numbers = #tpu.dot_dimension_numbers<[1], [0], [0], [1], [0, 0, 1, 1], [], []>} : vector<8x128xf32>, vector<128x512xf32>, vector<8x512xf32> -> vector<8x512xf32>
    %224 = arith.addf %222, %223 : vector<8x512xf32>
    %225 = vector.extract_strided_slice %224 {offsets = [0, 0], sizes = [8, 128], strides = [1, 1]} : vector<8x512xf32> to vector<8x128xf32>
    %226 = arith.negf %225 : vector<8x128xf32>
    %227 = math.exp %226 : vector<8x128xf32>
    %cst_68 = arith.constant 1.000000e+00 : f32
    %228 = vector.broadcast %cst_68 : f32 to vector<8x128xf32>
    %229 = arith.addf %228, %227 : vector<8x128xf32>
    %230 = arith.divf %228, %229 : vector<8x128xf32>
    %231 = vector.extract_strided_slice %224 {offsets = [0, 128], sizes = [8, 128], strides = [1, 1]} : vector<8x512xf32> to vector<8x128xf32>
    %232 = arith.negf %231 : vector<8x128xf32>
    %233 = math.exp %232 : vector<8x128xf32>
    %cst_69 = arith.constant 1.000000e+00 : f32
    %234 = vector.broadcast %cst_69 : f32 to vector<8x128xf32>
    %235 = arith.addf %234, %233 : vector<8x128xf32>
    %236 = arith.divf %234, %235 : vector<8x128xf32>
    %237 = vector.extract_strided_slice %224 {offsets = [0, 256], sizes = [8, 128], strides = [1, 1]} : vector<8x512xf32> to vector<8x128xf32>
    %238 = math.tanh %237 : vector<8x128xf32>
    %239 = vector.extract_strided_slice %224 {offsets = [0, 384], sizes = [8, 128], strides = [1, 1]} : vector<8x512xf32> to vector<8x128xf32>
    %240 = arith.negf %239 : vector<8x128xf32>
    %241 = math.exp %240 : vector<8x128xf32>
    %cst_70 = arith.constant 1.000000e+00 : f32
    %242 = vector.broadcast %cst_70 : f32 to vector<8x128xf32>
    %243 = arith.addf %242, %241 : vector<8x128xf32>
    %244 = arith.divf %242, %243 : vector<8x128xf32>
    %245 = arith.mulf %236, %213 : vector<8x128xf32>
    %246 = arith.mulf %230, %238 : vector<8x128xf32>
    %247 = arith.addf %245, %246 : vector<8x128xf32>
    %248 = math.tanh %247 : vector<8x128xf32>
    %249 = arith.mulf %244, %248 : vector<8x128xf32>
    %250 = arith.index_cast %c6_i32 : i32 to index
    %c0_71 = arith.constant 0 : index
    %c0_72 = arith.constant 0 : index
    %251 = vector.load %arg8[%250, %c0_71, %c0_72] : memref<8x8x128xf32, #tpu.memory_space<vmem>>, vector<1x8x128xf32>
    %252 = vector.shape_cast %251 : vector<1x8x128xf32> to vector<8x128xf32>
    %253 = vector.shape_cast %249 : vector<8x128xf32> to vector<1x8x128xf32>
    tpu.vector_store %arg8[%250, %c0_71, %c0_72], %253 {strides = array<i32>} : memref<8x8x128xf32, #tpu.memory_space<vmem>>, vector<1x8x128xf32>,
    %c7_i32 = arith.constant 7 : i32
    %254 = arith.index_cast %c7_i32 : i32 to index
    %c0_73 = arith.constant 0 : index
    %c0_74 = arith.constant 0 : index
    %255 = vector.load %arg11[%254, %c0_73, %c0_74] : memref<8x8x512xf32, #tpu.memory_space<vmem>>, vector<1x8x512xf32>
    %256 = vector.shape_cast %255 : vector<1x8x512xf32> to vector<8x512xf32>
    %cst_75 = arith.constant dense<0.000000e+00> : vector<8x512xf32>
    %257 = tpu.matmul %249, %4, %cst_75 {dimension_numbers = #tpu.dot_dimension_numbers<[1], [0], [0], [1], [0, 0, 1, 1], [], []>} : vector<8x128xf32>, vector<128x512xf32>, vector<8x512xf32> -> vector<8x512xf32>
    %258 = arith.addf %256, %257 : vector<8x512xf32>
    %259 = vector.extract_strided_slice %258 {offsets = [0, 0], sizes = [8, 128], strides = [1, 1]} : vector<8x512xf32> to vector<8x128xf32>
    %260 = arith.negf %259 : vector<8x128xf32>
    %261 = math.exp %260 : vector<8x128xf32>
    %cst_76 = arith.constant 1.000000e+00 : f32
    %262 = vector.broadcast %cst_76 : f32 to vector<8x128xf32>
    %263 = arith.addf %262, %261 : vector<8x128xf32>
    %264 = arith.divf %262, %263 : vector<8x128xf32>
    %265 = vector.extract_strided_slice %258 {offsets = [0, 128], sizes = [8, 128], strides = [1, 1]} : vector<8x512xf32> to vector<8x128xf32>
    %266 = arith.negf %265 : vector<8x128xf32>
    %267 = math.exp %266 : vector<8x128xf32>
    %cst_77 = arith.constant 1.000000e+00 : f32
    %268 = vector.broadcast %cst_77 : f32 to vector<8x128xf32>
    %269 = arith.addf %268, %267 : vector<8x128xf32>
    %270 = arith.divf %268, %269 : vector<8x128xf32>
    %271 = vector.extract_strided_slice %258 {offsets = [0, 256], sizes = [8, 128], strides = [1, 1]} : vector<8x512xf32> to vector<8x128xf32>
    %272 = math.tanh %271 : vector<8x128xf32>
    %273 = vector.extract_strided_slice %258 {offsets = [0, 384], sizes = [8, 128], strides = [1, 1]} : vector<8x512xf32> to vector<8x128xf32>
    %274 = arith.negf %273 : vector<8x128xf32>
    %275 = math.exp %274 : vector<8x128xf32>
    %cst_78 = arith.constant 1.000000e+00 : f32
    %276 = vector.broadcast %cst_78 : f32 to vector<8x128xf32>
    %277 = arith.addf %276, %275 : vector<8x128xf32>
    %278 = arith.divf %276, %277 : vector<8x128xf32>
    %279 = arith.mulf %270, %247 : vector<8x128xf32>
    %280 = arith.mulf %264, %272 : vector<8x128xf32>
    %281 = arith.addf %279, %280 : vector<8x128xf32>
    %282 = math.tanh %281 : vector<8x128xf32>
    %283 = arith.mulf %278, %282 : vector<8x128xf32>
    %284 = arith.index_cast %c7_i32 : i32 to index
    %c0_79 = arith.constant 0 : index
    %c0_80 = arith.constant 0 : index
    %285 = vector.load %arg8[%284, %c0_79, %c0_80] : memref<8x8x128xf32, #tpu.memory_space<vmem>>, vector<1x8x128xf32>
    %286 = vector.shape_cast %285 : vector<1x8x128xf32> to vector<8x128xf32>
    %287 = vector.shape_cast %283 : vector<8x128xf32> to vector<1x8x128xf32>
    tpu.vector_store %arg8[%284, %c0_79, %c0_80], %287 {strides = array<i32>} : memref<8x8x128xf32, #tpu.memory_space<vmem>>, vector<1x8x128xf32>,
    %c8_i32 = arith.constant 8 : i32
    %c0_81 = arith.constant 0 : index
    %c0_82 = arith.constant 0 : index
    %288 = vector.load %arg12[%c0_81, %c0_82] : memref<8x128xf32, #tpu.memory_space<vmem>>, vector<8x128xf32>
    tpu.vector_store %arg12[%c0_81, %c0_82], %283 {strides = array<i32>} : memref<8x128xf32, #tpu.memory_space<vmem>>, vector<8x128xf32>,
    %c0_83 = arith.constant 0 : index
    %c0_84 = arith.constant 0 : index
    %289 = vector.load %arg13[%c0_83, %c0_84] : memref<8x128xf32, #tpu.memory_space<vmem>>, vector<8x128xf32>
    tpu.vector_store %arg13[%c0_83, %c0_84], %281 {strides = array<i32>} : memref<8x128xf32, #tpu.memory_space<vmem>>, vector<8x128xf32>,
    %c0_i32_85 = arith.constant 0 : i32
    %290 = arith.cmpi eq, %arg1, %c0_i32_85 : i32
    %291 = arith.extui %290 : i1 to i32
    %c0_i32_86 = arith.constant 0 : i32
    %292 = arith.cmpi ne, %291, %c0_i32_86 : i32
    scf.if %292 {
      %c0_87 = arith.constant 0 : index
      %c0_88 = arith.constant 0 : index
      %293 = vector.load %arg9[%c0_87, %c0_88] : memref<8x128xf32, #tpu.memory_space<vmem>>, vector<8x128xf32>
      tpu.vector_store %arg9[%c0_87, %c0_88], %283 {strides = array<i32>} : memref<8x128xf32, #tpu.memory_space<vmem>>, vector<8x128xf32>,
      %c0_89 = arith.constant 0 : index
      %c0_90 = arith.constant 0 : index
      %294 = vector.load %arg10[%c0_89, %c0_90] : memref<8x128xf32, #tpu.memory_space<vmem>>, vector<8x128xf32>
      tpu.vector_store %arg10[%c0_89, %c0_90], %281 {strides = array<i32>} : memref<8x128xf32, #tpu.memory_space<vmem>>, vector<8x128xf32>,
    } else {
    }
    return
  }
  func.func @transform_0(%arg0: i32, %arg1: i32) -> (i32, i32, i32) {
    %c0_i32 = arith.constant 0 : i32
    %c0_i32_0 = arith.constant 0 : i32
    return %arg1, %arg0, %c0_i32 : i32, i32, i32
  }
  func.func @transform_1(%arg0: i32, %arg1: i32) -> (i32, i32) {
    %c0_i32 = arith.constant 0 : i32
    %c0_i32_0 = arith.constant 0 : i32
    return %arg0, %c0_i32 : i32, i32
  }
  func.func @transform_2(%arg0: i32, %arg1: i32) -> (i32, i32) {
    %c0_i32 = arith.constant 0 : i32
    %c0_i32_0 = arith.constant 0 : i32
    return %arg0, %c0_i32 : i32, i32
  }
  func.func @transform_3(%arg0: i32, %arg1: i32) -> (i32, i32) {
    %c0_i32 = arith.constant 0 : i32
    %c0_i32_0 = arith.constant 0 : i32
    %c0_i32_1 = arith.constant 0 : i32
    return %c0_i32, %c0_i32_0 : i32, i32
  }
  func.func @transform_4(%arg0: i32, %arg1: i32) -> (i32, i32) {
    %c0_i32 = arith.constant 0 : i32
    %c0_i32_0 = arith.constant 0 : i32
    %c0_i32_1 = arith.constant 0 : i32
    return %c0_i32, %c0_i32_0 : i32, i32
  }
  func.func @transform_5(%arg0: i32, %arg1: i32) -> (i32, i32) {
    %c0_i32 = arith.constant 0 : i32
    %c0_i32_0 = arith.constant 0 : i32
    %c0_i32_1 = arith.constant 0 : i32
    return %c0_i32, %c0_i32_0 : i32, i32
  }
  func.func @transform_6(%arg0: i32, %arg1: i32) -> (i32, i32, i32) {
    %c0_i32 = arith.constant 0 : i32
    %c0_i32_0 = arith.constant 0 : i32
    return %arg1, %arg0, %c0_i32 : i32, i32, i32
  }
  func.func @transform_7(%arg0: i32, %arg1: i32) -> (i32, i32) {
    %c0_i32 = arith.constant 0 : i32
    %c0_i32_0 = arith.constant 0 : i32
    return %arg0, %c0_i32 : i32, i32
  }
  func.func @transform_8(%arg0: i32, %arg1: i32) -> (i32, i32) {
    %c0_i32 = arith.constant 0 : i32
    %c0_i32_0 = arith.constant 0 : i32
    return %arg0, %c0_i32 : i32, i32
  }
}

</mosaic_0001>

<llo_original>
// kernel: seq2seq_forward.1
$region0: #{seq2seq_forward.1}
  #allocation0 [shape = 'u32[]', space=smem, size = 0x4, offset = 0x4, fixed_abs, tag = 'smem constant byte address 0x4 - core index']
  #allocation1 [shape = 'u32[72,128]{1,0:T(1,128)}', space=vmem, size = 0x9000, scoped, tag = 'internal scratch']
  #allocation2 [shape = 'f32[8,8,512]{2,1,0:T(8,128)}', space=vmem, size = 0x20000, scoped, tag = 'scratch operand']
  #allocation3 [shape = 'f32[8,128]{1,0:T(8,128)}', space=vmem, size = 0x1000, scoped, tag = 'scratch operand']
  #allocation4 [shape = 'f32[8,128]{1,0:T(8,128)}', space=vmem, size = 0x1000, scoped, tag = 'scratch operand']
  %s0 = inlined_call_operand.vmem [shape: f32[8,8,128], index: 0, kind: input, shape index: {}]
  %s1 = inlined_call_operand.vmem [shape: f32[8,128], index: 1, kind: input, shape index: {}]
  %s2 = inlined_call_operand.vmem [shape: f32[8,128], index: 2, kind: input, shape index: {}]
  %s3 = inlined_call_operand.vmem [shape: f32[128,512], index: 3, kind: input, shape index: {}]
  %s4 = inlined_call_operand.vmem [shape: f32[128,512], index: 4, kind: input, shape index: {}]
  %s5 = inlined_call_operand.vmem [shape: f32[1,512], index: 5, kind: input, shape index: {}]
  %s6 = inlined_call_operand.vmem [shape: f32[8,8,128], index: 6, kind: output, shape index: {0}]
  %s7 = inlined_call_operand.vmem [shape: f32[8,128], index: 7, kind: output, shape index: {1}]
  %s8 = inlined_call_operand.vmem [shape: f32[8,128], index: 8, kind: output, shape index: {2}]
  %9 = xla_tuple %s6, %s7, %s8
  %s10 = sld [smem:[#allocation0]]
  $region58: #{seq2seq_forward.1} parent=0
    _
  %s12 = ssub.s32 1, %s10
  %s13 = scalar_select 0, %s12, %s10
  // Predicated region
  $region2: #{seq2seq_forward.1} parent=0 // pred_check
    _
  $region3: #{seq2seq_forward.1} parent=0 // pred_check_branch
    %15 = sbr.rel (0) target = $region5
  $region4: #{seq2seq_forward.1} parent=0 // pred_region
    _
  $region5: #{seq2seq_forward.1} parent=0 // pred_fallthru
    _
  // Predicated region
  $region6: #{seq2seq_forward.1} parent=0 // pred_check
    _
  $region7: #{seq2seq_forward.1} parent=0 // pred_check_branch
    %17 = sbr.rel (0) target = $region9
  $region8: #{seq2seq_forward.1} parent=0 // pred_region
    _
  $region9: #{seq2seq_forward.1} parent=0 // pred_fallthru
    _
  // Predicated region
  $region10: #{seq2seq_forward.1} parent=0 // pred_check
    _
  $region11: #{seq2seq_forward.1} parent=0 // pred_check_branch
    %19 = sbr.rel (0) target = $region13
  $region12: #{seq2seq_forward.1} parent=0 // pred_region
    _
  $region13: #{seq2seq_forward.1} parent=0 // pred_fallthru
    _
  // Predicated region
  $region14: #{seq2seq_forward.1} parent=0 // pred_check
    _
  $region15: #{seq2seq_forward.1} parent=0 // pred_check_branch
    %21 = sbr.rel (0) target = $region17
  $region16: #{seq2seq_forward.1} parent=0 // pred_region
    _
  $region17: #{seq2seq_forward.1} parent=0 // pred_fallthru
    _
  // Predicated region
  $region18: #{seq2seq_forward.1} parent=0 // pred_check
    _
  $region19: #{seq2seq_forward.1} parent=0 // pred_check_branch
    %23 = sbr.rel (0) target = $region21
  $region20: #{seq2seq_forward.1} parent=0 // pred_region
    _
  $region21: #{seq2seq_forward.1} parent=0 // pred_fallthru
    _
  // Predicated region
  $region22: #{seq2seq_forward.1} parent=0 // pred_check
    _
  $region23: #{seq2seq_forward.1} parent=0 // pred_check_branch
    %25 = sbr.rel (0) target = $region25
  $region24: #{seq2seq_forward.1} parent=0 // pred_region
    _
  $region25: #{seq2seq_forward.1} parent=0 // pred_fallthru
    _
  %p26 = scmp.eq.s32.totalorder 0, 0
  // Predicated region
  $region26: #{seq2seq_forward.1} parent=0 // pred_check
    %p27 = pneg %p26
  $region27: #{seq2seq_forward.1} parent=0 // pred_check_branch
    %29 = sbr.rel (%p27) target = $region29
  $region28: #{seq2seq_forward.1} parent=0 // pred_region
    %v30 = vld [vmem:[%s1] sm:$0xff]
    %31 = vst [vmem:[#allocation3] sm:$0xff] %v30
    %v32 = vld [vmem:[%s2] sm:$0xff]
    %33 = vst [vmem:[#allocation4] sm:$0xff] %v32
  $region29: #{seq2seq_forward.1} parent=0 // pred_fallthru
    _
  %v34 = vld [vmem:[%s3] sm:$0xff]
  %v35 = vld [vmem:[%s3 + $0x8] sm:$0xff]
  %v36 = vld [vmem:[%s3 + $0x10] sm:$0xff]
  %v37 = vld [vmem:[%s3 + $0x18] sm:$0xff]
  %v38 = vld [vmem:[%s3 + $0x20] sm:$0xff]
  %v39 = vld [vmem:[%s3 + $0x28] sm:$0xff]
  %v40 = vld [vmem:[%s3 + $0x30] sm:$0xff]
  %v41 = vld [vmem:[%s3 + $0x38] sm:$0xff]
  %v42 = vld [vmem:[%s3 + $0x40] sm:$0xff]
  %v43 = vld [vmem:[%s3 + $0x48] sm:$0xff]
  %v44 = vld [vmem:[%s3 + $0x50] sm:$0xff]
  %v45 = vld [vmem:[%s3 + $0x58] sm:$0xff]
  %v46 = vld [vmem:[%s3 + $0x60] sm:$0xff]
  %v47 = vld [vmem:[%s3 + $0x68] sm:$0xff]
  %v48 = vld [vmem:[%s3 + $0x70] sm:$0xff]
  %v49 = vld [vmem:[%s3 + $0x78] sm:$0xff]
  %v50 = vld [vmem:[%s3 + $0x80] sm:$0xff]
  %v51 = vld [vmem:[%s3 + $0x88] sm:$0xff]
  %v52 = vld [vmem:[%s3 + $0x90] sm:$0xff]
  %v53 = vld [vmem:[%s3 + $0x98] sm:$0xff]
  %v54 = vld [vmem:[%s3 + $0xa0] sm:$0xff]
  %v55 = vld [vmem:[%s3 + $0xa8] sm:$0xff]
  %v56 = vld [vmem:[%s3 + $0xb0] sm:$0xff]
  %v57 = vld [vmem:[%s3 + $0xb8] sm:$0xff]
  %v58 = vld [vmem:[%s3 + $0xc0] sm:$0xff]
  %v59 = vld [vmem:[%s3 + $0xc8] sm:$0xff]
  %v60 = vld [vmem:[%s3 + $0xd0] sm:$0xff]
  %v61 = vld [vmem:[%s3 + $0xd8] sm:$0xff]
  %v62 = vld [vmem:[%s3 + $0xe0] sm:$0xff]
  %v63 = vld [vmem:[%s3 + $0xe8] sm:$0xff]
  %v64 = vld [vmem:[%s3 + $0xf0] sm:$0xff]
  %v65 = vld [vmem:[%s3 + $0xf8] sm:$0xff]
  %v66 = vld [vmem:[%s3 + $0x100] sm:$0xff]
  %v67 = vld [vmem:[%s3 + $0x108] sm:$0xff]
  %v68 = vld [vmem:[%s3 + $0x110] sm:$0xff]
  %v69 = vld [vmem:[%s3 + $0x118] sm:$0xff]
  %v70 = vld [vmem:[%s3 + $0x120] sm:$0xff]
  %v71 = vld [vmem:[%s3 + $0x128] sm:$0xff]
  %v72 = vld [vmem:[%s3 + $0x130] sm:$0xff]
  %v73 = vld [vmem:[%s3 + $0x138] sm:$0xff]
  %v74 = vld [vmem:[%s3 + $0x140] sm:$0xff]
  %v75 = vld [vmem:[%s3 + $0x148] sm:$0xff]
  %v76 = vld [vmem:[%s3 + $0x150] sm:$0xff]
  %v77 = vld [vmem:[%s3 + $0x158] sm:$0xff]
  %v78 = vld [vmem:[%s3 + $0x160] sm:$0xff]
  %v79 = vld [vmem:[%s3 + $0x168] sm:$0xff]
  %v80 = vld [vmem:[%s3 + $0x170] sm:$0xff]
  %v81 = vld [vmem:[%s3 + $0x178] sm:$0xff]
  %v82 = vld [vmem:[%s3 + $0x180] sm:$0xff]
  %v83 = vld [vmem:[%s3 + $0x188] sm:$0xff]
  %v84 = vld [vmem:[%s3 + $0x190] sm:$0xff]
  %v85 = vld [vmem:[%s3 + $0x198] sm:$0xff]
  %v86 = vld [vmem:[%s3 + $0x1a0] sm:$0xff]
  %v87 = vld [vmem:[%s3 + $0x1a8] sm:$0xff]
  %v88 = vld [vmem:[%s3 + $0x1b0] sm:$0xff]
  %v89 = vld [vmem:[%s3 + $0x1b8] sm:$0xff]
  %v90 = vld [vmem:[%s3 + $0x1c0] sm:$0xff]
  %v91 = vld [vmem:[%s3 + $0x1c8] sm:$0xff]
  %v92 = vld [vmem:[%s3 + $0x1d0] sm:$0xff]
  %v93 = vld [vmem:[%s3 + $0x1d8] sm:$0xff]
  %v94 = vld [vmem:[%s3 + $0x1e0] sm:$0xff]
  %v95 = vld [vmem:[%s3 + $0x1e8] sm:$0xff]
  %v96 = vld [vmem:[%s3 + $0x1f0] sm:$0xff]
  %v97 = vld [vmem:[%s3 + $0x1f8] sm:$0xff]
  %v98 = vld [vmem:[%s4] sm:$0xff]
  %v99 = vld [vmem:[%s4 + $0x8] sm:$0xff]
  %v100 = vld [vmem:[%s4 + $0x10] sm:$0xff]
  %v101 = vld [vmem:[%s4 + $0x18] sm:$0xff]
  %v102 = vld [vmem:[%s4 + $0x20] sm:$0xff]
  %v103 = vld [vmem:[%s4 + $0x28] sm:$0xff]
  %v104 = vld [vmem:[%s4 + $0x30] sm:$0xff]
  %v105 = vld [vmem:[%s4 + $0x38] sm:$0xff]
  %v106 = vld [vmem:[%s4 + $0x40] sm:$0xff]
  %v107 = vld [vmem:[%s4 + $0x48] sm:$0xff]
  %v108 = vld [vmem:[%s4 + $0x50] sm:$0xff]
  %v109 = vld [vmem:[%s4 + $0x58] sm:$0xff]
  %v110 = vld [vmem:[%s4 + $0x60] sm:$0xff]
  %v111 = vld [vmem:[%s4 + $0x68] sm:$0xff]
  %v112 = vld [vmem:[%s4 + $0x70] sm:$0xff]
  %v113 = vld [vmem:[%s4 + $0x78] sm:$0xff]
  %v114 = vld [vmem:[%s4 + $0x80] sm:$0xff]
  %v115 = vld [vmem:[%s4 + $0x88] sm:$0xff]
  %v116 = vld [vmem:[%s4 + $0x90] sm:$0xff]
  %v117 = vld [vmem:[%s4 + $0x98] sm:$0xff]
  %v118 = vld [vmem:[%s4 + $0xa0] sm:$0xff]
  %v119 = vld [vmem:[%s4 + $0xa8] sm:$0xff]
  %v120 = vld [vmem:[%s4 + $0xb0] sm:$0xff]
  %v121 = vld [vmem:[%s4 + $0xb8] sm:$0xff]
  %v122 = vld [vmem:[%s4 + $0xc0] sm:$0xff]
  %v123 = vld [vmem:[%s4 + $0xc8] sm:$0xff]
  %v124 = vld [vmem:[%s4 + $0xd0] sm:$0xff]
  %v125 = vld [vmem:[%s4 + $0xd8] sm:$0xff]
  %v126 = vld [vmem:[%s4 + $0xe0] sm:$0xff]
  %v127 = vld [vmem:[%s4 + $0xe8] sm:$0xff]
  %v128 = vld [vmem:[%s4 + $0xf0] sm:$0xff]
  %v129 = vld [vmem:[%s4 + $0xf8] sm:$0xff]
  %v130 = vld [vmem:[%s4 + $0x100] sm:$0xff]
  %v131 = vld [vmem:[%s4 + $0x108] sm:$0xff]
  %v132 = vld [vmem:[%s4 + $0x110] sm:$0xff]
  %v133 = vld [vmem:[%s4 + $0x118] sm:$0xff]
  %v134 = vld [vmem:[%s4 + $0x120] sm:$0xff]
  %v135 = vld [vmem:[%s4 + $0x128] sm:$0xff]
  %v136 = vld [vmem:[%s4 + $0x130] sm:$0xff]
  %v137 = vld [vmem:[%s4 + $0x138] sm:$0xff]
  %v138 = vld [vmem:[%s4 + $0x140] sm:$0xff]
  %v139 = vld [vmem:[%s4 + $0x148] sm:$0xff]
  %v140 = vld [vmem:[%s4 + $0x150] sm:$0xff]
  %v141 = vld [vmem:[%s4 + $0x158] sm:$0xff]
  %v142 = vld [vmem:[%s4 + $0x160] sm:$0xff]
  %v143 = vld [vmem:[%s4 + $0x168] sm:$0xff]
  %v144 = vld [vmem:[%s4 + $0x170] sm:$0xff]
  %v145 = vld [vmem:[%s4 + $0x178] sm:$0xff]
  %v146 = vld [vmem:[%s4 + $0x180] sm:$0xff]
  %v147 = vld [vmem:[%s4 + $0x188] sm:$0xff]
  %v148 = vld [vmem:[%s4 + $0x190] sm:$0xff]
  %v149 = vld [vmem:[%s4 + $0x198] sm:$0xff]
  %v150 = vld [vmem:[%s4 + $0x1a0] sm:$0xff]
  %v151 = vld [vmem:[%s4 + $0x1a8] sm:$0xff]
  %v152 = vld [vmem:[%s4 + $0x1b0] sm:$0xff]
  %v153 = vld [vmem:[%s4 + $0x1b8] sm:$0xff]
  %v154 = vld [vmem:[%s4 + $0x1c0] sm:$0xff]
  %v155 = vld [vmem:[%s4 + $0x1c8] sm:$0xff]
  %v156 = vld [vmem:[%s4 + $0x1d0] sm:$0xff]
  %v157 = vld [vmem:[%s4 + $0x1d8] sm:$0xff]
  %v158 = vld [vmem:[%s4 + $0x1e0] sm:$0xff]
  %v159 = vld [vmem:[%s4 + $0x1e8] sm:$0xff]
  %v160 = vld [vmem:[%s4 + $0x1f0] sm:$0xff]
  %v161 = vld [vmem:[%s4 + $0x1f8] sm:$0xff]
  %v162 = vld [vmem:[%s0] sm:$0xff]
  %v163 = vld [vmem:[%s0 + $0x8] sm:$0xff]
  %v164 = vld [vmem:[%s0 + $0x10] sm:$0xff]
  %v165 = vld [vmem:[%s0 + $0x18] sm:$0xff]
  %v166 = vld [vmem:[%s0 + $0x20] sm:$0xff]
  %v167 = vld [vmem:[%s0 + $0x28] sm:$0xff]
  %v168 = vld [vmem:[%s0 + $0x30] sm:$0xff]
  %v169 = vld [vmem:[%s0 + $0x38] sm:$0xff]
  %170 = vmatpush.msra.mxu0 %v94
  %171 = vmatpush.msra.mxu0 %v90
  %172 = vmatpush.msra.mxu0 %v86
  %173 = vmatpush.msra.mxu0 %v82
  %174 = vmatpush.msra.mxu0 %v78
  %175 = vmatpush.msra.mxu0 %v74
  %176 = vmatpush.msra.mxu0 %v70
  %177 = vmatpush.msra.mxu0 %v66
  %178 = vmatpush.msra.mxu0 %v62
  %179 = vmatpush.msra.mxu0 %v58
  %180 = vmatpush.msra.mxu0 %v54
  %181 = vmatpush.msra.mxu0 %v50
  %182 = vmatpush.msra.mxu0 %v46
  %183 = vmatpush.msra.mxu0 %v42
  %184 = vmatpush.msra.mxu0 %v38
  %185 = vmatpush.msra.mxu0 %v34
  %186 = vmatmul.f32.gmra.mxu0 %v162
  %v187 = vpop.f32.mrf.mxu0
  %v188 = vadd.f32 0.0, %v187
  %189 = vmatmul.f32.gmra.mxu0 %v163
  %v190 = vpop.f32.mrf.mxu0
  %v191 = vadd.f32 0.0, %v190
  %192 = vmatmul.f32.gmra.mxu0 %v164
  %v193 = vpop.f32.mrf.mxu0
  %v194 = vadd.f32 0.0, %v193
  %195 = vmatmul.f32.gmra.mxu0 %v165
  %v196 = vpop.f32.mrf.mxu0
  %v197 = vadd.f32 0.0, %v196
  %198 = vmatmul.f32.gmra.mxu0 %v166
  %v199 = vpop.f32.mrf.mxu0
  %v200 = vadd.f32 0.0, %v199
  %201 = vmatmul.f32.gmra.mxu0 %v167
  %v202 = vpop.f32.mrf.mxu0
  %v203 = vadd.f32 0.0, %v202
  %204 = vmatmul.f32.gmra.mxu0 %v168
  %v205 = vpop.f32.mrf.mxu0
  %v206 = vadd.f32 0.0, %v205
  %207 = vmatmul.f32.gmra.mxu0 %v169
  %v208 = vpop.f32.mrf.mxu0
  %v209 = vadd.f32 0.0, %v208
  %210 = vdwg.mxu0
  %211 = vmatpush.msra.mxu0 %v95
  %212 = vmatpush.msra.mxu0 %v91
  %213 = vmatpush.msra.mxu0 %v87
  %214 = vmatpush.msra.mxu0 %v83
  %215 = vmatpush.msra.mxu0 %v79
  %216 = vmatpush.msra.mxu0 %v75
  %217 = vmatpush.msra.mxu0 %v71
  %218 = vmatpush.msra.mxu0 %v67
  %219 = vmatpush.msra.mxu0 %v63
  %220 = vmatpush.msra.mxu0 %v59
  %221 = vmatpush.msra.mxu0 %v55
  %222 = vmatpush.msra.mxu0 %v51
  %223 = vmatpush.msra.mxu0 %v47
  %224 = vmatpush.msra.mxu0 %v43
  %225 = vmatpush.msra.mxu0 %v39
  %226 = vmatpush.msra.mxu0 %v35
  %227 = vmatmul.f32.gmra.mxu0 %v162
  %v228 = vpop.f32.mrf.mxu0
  %v229 = vadd.f32 0.0, %v228
  %230 = vmatmul.f32.gmra.mxu0 %v163
  %v231 = vpop.f32.mrf.mxu0
  %v232 = vadd.f32 0.0, %v231
  %233 = vmatmul.f32.gmra.mxu0 %v164
  %v234 = vpop.f32.mrf.mxu0
  %v235 = vadd.f32 0.0, %v234
  %236 = vmatmul.f32.gmra.mxu0 %v165
  %v237 = vpop.f32.mrf.mxu0
  %v238 = vadd.f32 0.0, %v237
  %239 = vmatmul.f32.gmra.mxu0 %v166
  %v240 = vpop.f32.mrf.mxu0
  %v241 = vadd.f32 0.0, %v240
  %242 = vmatmul.f32.gmra.mxu0 %v167
  %v243 = vpop.f32.mrf.mxu0
  %v244 = vadd.f32 0.0, %v243
  %245 = vmatmul.f32.gmra.mxu0 %v168
  %v246 = vpop.f32.mrf.mxu0
  %v247 = vadd.f32 0.0, %v246
  %248 = vmatmul.f32.gmra.mxu0 %v169
  %v249 = vpop.f32.mrf.mxu0
  %v250 = vadd.f32 0.0, %v249
  %251 = vdwg.mxu0
  %252 = vmatpush.msra.mxu0 %v96
  %253 = vmatpush.msra.mxu0 %v92
  %254 = vmatpush.msra.mxu0 %v88
  %255 = vmatpush.msra.mxu0 %v84
  %256 = vmatpush.msra.mxu0 %v80
  %257 = vmatpush.msra.mxu0 %v76
  %258 = vmatpush.msra.mxu0 %v72
  %259 = vmatpush.msra.mxu0 %v68
  %260 = vmatpush.msra.mxu0 %v64
  %261 = vmatpush.msra.mxu0 %v60
  %262 = vmatpush.msra.mxu0 %v56
  %263 = vmatpush.msra.mxu0 %v52
  %264 = vmatpush.msra.mxu0 %v48
  %265 = vmatpush.msra.mxu0 %v44
  %266 = vmatpush.msra.mxu0 %v40
  %267 = vmatpush.msra.mxu0 %v36
  %268 = vmatmul.f32.gmra.mxu0 %v162
  %v269 = vpop.f32.mrf.mxu0
  %v270 = vadd.f32 0.0, %v269
  %271 = vmatmul.f32.gmra.mxu0 %v163
  %v272 = vpop.f32.mrf.mxu0
  %v273 = vadd.f32 0.0, %v272
  %274 = vmatmul.f32.gmra.mxu0 %v164
  %v275 = vpop.f32.mrf.mxu0
  %v276 = vadd.f32 0.0, %v275
  %277 = vmatmul.f32.gmra.mxu0 %v165
  %v278 = vpop.f32.mrf.mxu0
  %v279 = vadd.f32 0.0, %v278
  %280 = vmatmul.f32.gmra.mxu0 %v166
  %v281 = vpop.f32.mrf.mxu0
  %v282 = vadd.f32 0.0, %v281
  %283 = vmatmul.f32.gmra.mxu0 %v167
  %v284 = vpop.f32.mrf.mxu0
  %v285 = vadd.f32 0.0, %v284
  %286 = vmatmul.f32.gmra.mxu0 %v168
  %v287 = vpop.f32.mrf.mxu0
  %v288 = vadd.f32 0.0, %v287
  %289 = vmatmul.f32.gmra.mxu0 %v169
  %v290 = vpop.f32.mrf.mxu0
  %v291 = vadd.f32 0.0, %v290
  %292 = vdwg.mxu0
  %293 = vmatpush.msra.mxu0 %v97
  %294 = vmatpush.msra.mxu0 %v93
  %295 = vmatpush.msra.mxu0 %v89
  %296 = vmatpush.msra.mxu0 %v85
  %297 = vmatpush.msra.mxu0 %v81
  %298 = vmatpush.msra.mxu0 %v77
  %299 = vmatpush.msra.mxu0 %v73
  %300 = vmatpush.msra.mxu0 %v69
  %301 = vmatpush.msra.mxu0 %v65
  %302 = vmatpush.msra.mxu0 %v61
  %303 = vmatpush.msra.mxu0 %v57
  %304 = vmatpush.msra.mxu0 %v53
  %305 = vmatpush.msra.mxu0 %v49
  %306 = vmatpush.msra.mxu0 %v45
  %307 = vmatpush.msra.mxu0 %v41
  %308 = vmatpush.msra.mxu0 %v37
  %309 = vmatmul.f32.gmra.mxu0 %v162
  %v310 = vpop.f32.mrf.mxu0
  %v311 = vadd.f32 0.0, %v310
  %312 = vmatmul.f32.gmra.mxu0 %v163
  %v313 = vpop.f32.mrf.mxu0
  %v314 = vadd.f32 0.0, %v313
  %315 = vmatmul.f32.gmra.mxu0 %v164
  %v316 = vpop.f32.mrf.mxu0
  %v317 = vadd.f32 0.0, %v316
  %318 = vmatmul.f32.gmra.mxu0 %v165
  %v319 = vpop.f32.mrf.mxu0
  %v320 = vadd.f32 0.0, %v319
  %321 = vmatmul.f32.gmra.mxu0 %v166
  %v322 = vpop.f32.mrf.mxu0
  %v323 = vadd.f32 0.0, %v322
  %324 = vmatmul.f32.gmra.mxu0 %v167
  %v325 = vpop.f32.mrf.mxu0
  %v326 = vadd.f32 0.0, %v325
  %327 = vmatmul.f32.gmra.mxu0 %v168
  %v328 = vpop.f32.mrf.mxu0
  %v329 = vadd.f32 0.0, %v328
  %330 = vmatmul.f32.gmra.mxu0 %v169
  %v331 = vpop.f32.mrf.mxu0
  %v332 = vadd.f32 0.0, %v331
  %333 = vdwg.mxu0
  %v334 = vld [vmem:[%s5] sm:$0xf]
  %v336 = vperm.slane %v334, 0
  %v337 = vperm.slane %v334, 1
  %v338 = vperm.slane %v334, 2
  %v339 = vperm.slane %v334, 3
  %v344 = vadd.f32 %v188, %v336
  %v345 = vadd.f32 %v229, %v337
  %v346 = vadd.f32 %v270, %v338
  %v347 = vadd.f32 %v311, %v339
  %v348 = vadd.f32 %v191, %v336
  %v349 = vadd.f32 %v232, %v337
  %v350 = vadd.f32 %v273, %v338
  %v351 = vadd.f32 %v314, %v339
  %v352 = vadd.f32 %v194, %v336
  %v353 = vadd.f32 %v235, %v337
  %v354 = vadd.f32 %v276, %v338
  %v355 = vadd.f32 %v317, %v339
  %v356 = vadd.f32 %v197, %v336
  %v357 = vadd.f32 %v238, %v337
  %v358 = vadd.f32 %v279, %v338
  %v359 = vadd.f32 %v320, %v339
  %v360 = vadd.f32 %v200, %v336
  %v361 = vadd.f32 %v241, %v337
  %v362 = vadd.f32 %v282, %v338
  %v363 = vadd.f32 %v323, %v339
  %v364 = vadd.f32 %v203, %v336
  %v365 = vadd.f32 %v244, %v337
  %v366 = vadd.f32 %v285, %v338
  %v367 = vadd.f32 %v326, %v339
  %v368 = vadd.f32 %v206, %v336
  %v369 = vadd.f32 %v247, %v337
  %v370 = vadd.f32 %v288, %v338
  %v371 = vadd.f32 %v329, %v339
  %v372 = vadd.f32 %v209, %v336
  %v373 = vadd.f32 %v250, %v337
  %v374 = vadd.f32 %v291, %v338
  %v375 = vadd.f32 %v332, %v339
  %376 = vst [vmem:[#allocation2] sm:$0xff] %v344
  %377 = vst [vmem:[#allocation2 + $0x8] sm:$0xff] %v345
  %378 = vst [vmem:[#allocation2 + $0x10] sm:$0xff] %v346
  %379 = vst [vmem:[#allocation2 + $0x18] sm:$0xff] %v347
  %380 = vst [vmem:[#allocation2 + $0x20] sm:$0xff] %v348
  %381 = vst [vmem:[#allocation2 + $0x28] sm:$0xff] %v349
  %382 = vst [vmem:[#allocation2 + $0x30] sm:$0xff] %v350
  %383 = vst [vmem:[#allocation2 + $0x38] sm:$0xff] %v351
  %384 = vst [vmem:[#allocation2 + $0x40] sm:$0xff] %v352
  %385 = vst [vmem:[#allocation2 + $0x48] sm:$0xff] %v353
  %386 = vst [vmem:[#allocation2 + $0x50] sm:$0xff] %v354
  %387 = vst [vmem:[#allocation2 + $0x58] sm:$0xff] %v355
  %388 = vst [vmem:[#allocation2 + $0x60] sm:$0xff] %v356
  %389 = vst [vmem:[#allocation2 + $0x68] sm:$0xff] %v357
  %390 = vst [vmem:[#allocation2 + $0x70] sm:$0xff] %v358
  %391 = vst [vmem:[#allocation2 + $0x78] sm:$0xff] %v359
  %392 = vst [vmem:[#allocation2 + $0x80] sm:$0xff] %v360
  %393 = vst [vmem:[#allocation2 + $0x88] sm:$0xff] %v361
  %394 = vst [vmem:[#allocation2 + $0x90] sm:$0xff] %v362
  %395 = vst [vmem:[#allocation2 + $0x98] sm:$0xff] %v363
  %396 = vst [vmem:[#allocation2 + $0xa0] sm:$0xff] %v364
  %397 = vst [vmem:[#allocation2 + $0xa8] sm:$0xff] %v365
  %398 = vst [vmem:[#allocation2 + $0xb0] sm:$0xff] %v366
  %399 = vst [vmem:[#allocation2 + $0xb8] sm:$0xff] %v367
  %400 = vst [vmem:[#allocation2 + $0xc0] sm:$0xff] %v368
  %401 = vst [vmem:[#allocation2 + $0xc8] sm:$0xff] %v369
  %402 = vst [vmem:[#allocation2 + $0xd0] sm:$0xff] %v370
  %403 = vst [vmem:[#allocation2 + $0xd8] sm:$0xff] %v371
  %404 = vst [vmem:[#allocation2 + $0xe0] sm:$0xff] %v372
  %405 = vst [vmem:[#allocation2 + $0xe8] sm:$0xff] %v373
  %406 = vst [vmem:[#allocation2 + $0xf0] sm:$0xff] %v374
  %407 = vst [vmem:[#allocation2 + $0xf8] sm:$0xff] %v375
  %v408 = vld [vmem:[#allocation3] sm:$0xff]
  %v409 = vld [vmem:[#allocation4] sm:$0xff]
  %v410 = vld [vmem:[#allocation2] sm:$0xff]
  %v411 = vld [vmem:[#allocation2 + $0x8] sm:$0xff]
  %v412 = vld [vmem:[#allocation2 + $0x10] sm:$0xff]
  %v413 = vld [vmem:[#allocation2 + $0x18] sm:$0xff]
  %414 = vmatpush.msra.mxu0 %v158
  %415 = vmatpush.msra.mxu0 %v154
  %416 = vmatpush.msra.mxu0 %v150
  %417 = vmatpush.msra.mxu0 %v146
  %418 = vmatpush.msra.mxu0 %v142
  %419 = vmatpush.msra.mxu0 %v138
  %420 = vmatpush.msra.mxu0 %v134
  %421 = vmatpush.msra.mxu0 %v130
  %422 = vmatpush.msra.mxu0 %v126
  %423 = vmatpush.msra.mxu0 %v122
  %424 = vmatpush.msra.mxu0 %v118
  %425 = vmatpush.msra.mxu0 %v114
  %426 = vmatpush.msra.mxu0 %v110
  %427 = vmatpush.msra.mxu0 %v106
  %428 = vmatpush.msra.mxu0 %v102
  %429 = vmatpush.msra.mxu0 %v98
  %430 = vmatmul.f32.gmra.mxu0 %v408
  %v431 = vpop.f32.mrf.mxu0
  %v432 = vadd.f32 0.0, %v431
  %433 = vdwg.mxu0
  %434 = vmatpush.msra.mxu0 %v159
  %435 = vmatpush.msra.mxu0 %v155
  %436 = vmatpush.msra.mxu0 %v151
  %437 = vmatpush.msra.mxu0 %v147
  %438 = vmatpush.msra.mxu0 %v143
  %439 = vmatpush.msra.mxu0 %v139
  %440 = vmatpush.msra.mxu0 %v135
  %441 = vmatpush.msra.mxu0 %v131
  %442 = vmatpush.msra.mxu0 %v127
  %443 = vmatpush.msra.mxu0 %v123
  %444 = vmatpush.msra.mxu0 %v119
  %445 = vmatpush.msra.mxu0 %v115
  %446 = vmatpush.msra.mxu0 %v111
  %447 = vmatpush.msra.mxu0 %v107
  %448 = vmatpush.msra.mxu0 %v103
  %449 = vmatpush.msra.mxu0 %v99
  %450 = vmatmul.f32.gmra.mxu0 %v408
  %v451 = vpop.f32.mrf.mxu0
  %v452 = vadd.f32 0.0, %v451
  %453 = vdwg.mxu0
  %454 = vmatpush.msra.mxu0 %v160
  %455 = vmatpush.msra.mxu0 %v156
  %456 = vmatpush.msra.mxu0 %v152
  %457 = vmatpush.msra.mxu0 %v148
  %458 = vmatpush.msra.mxu0 %v144
  %459 = vmatpush.msra.mxu0 %v140
  %460 = vmatpush.msra.mxu0 %v136
  %461 = vmatpush.msra.mxu0 %v132
  %462 = vmatpush.msra.mxu0 %v128
  %463 = vmatpush.msra.mxu0 %v124
  %464 = vmatpush.msra.mxu0 %v120
  %465 = vmatpush.msra.mxu0 %v116
  %466 = vmatpush.msra.mxu0 %v112
  %467 = vmatpush.msra.mxu0 %v108
  %468 = vmatpush.msra.mxu0 %v104
  %469 = vmatpush.msra.mxu0 %v100
  %470 = vmatmul.f32.gmra.mxu0 %v408
  %v471 = vpop.f32.mrf.mxu0
  %v472 = vadd.f32 0.0, %v471
  %473 = vdwg.mxu0
  %474 = vmatpush.msra.mxu0 %v161
  %475 = vmatpush.msra.mxu0 %v157
  %476 = vmatpush.msra.mxu0 %v153
  %477 = vmatpush.msra.mxu0 %v149
  %478 = vmatpush.msra.mxu0 %v145
  %479 = vmatpush.msra.mxu0 %v141
  %480 = vmatpush.msra.mxu0 %v137
  %481 = vmatpush.msra.mxu0 %v133
  %482 = vmatpush.msra.mxu0 %v129
  %483 = vmatpush.msra.mxu0 %v125
  %484 = vmatpush.msra.mxu0 %v121
  %485 = vmatpush.msra.mxu0 %v117
  %486 = vmatpush.msra.mxu0 %v113
  %487 = vmatpush.msra.mxu0 %v109
  %488 = vmatpush.msra.mxu0 %v105
  %489 = vmatpush.msra.mxu0 %v101
  %490 = vmatmul.f32.gmra.mxu0 %v408
  %v491 = vpop.f32.mrf.mxu0
  %v492 = vadd.f32 0.0, %v491
  %493 = vdwg.mxu0
  %v494 = vadd.f32 %v410, %v432
  %v495 = vadd.f32 %v411, %v452
  %v496 = vadd.f32 %v412, %v472
  %v497 = vadd.f32 %v413, %v492
  %v498 = vxor.u32 %v494, 2147483648
  %v499 = vmul.f32 %v498, 1.442695
  %v500 = vpow.pop %v499
  %v501 = vadd.f32 %v500, 1.0
  %v502 = vrcp.pop %v501
  %v503 = vmul.f32 %v501, %v502
  %v504 = vsub.f32 1.0, %v503
  %v505 = vmul.f32 %v502, %v504
  %v506 = vadd.f32 %v502, %v505
  %vm507 = vweird.f32 %v501
  %vm508 = vweird.f32 %v502
  %vm509 = vmor %vm507, %vm508
  %v510 = vsel %vm509, %v502, %v506
  %v511 = vand.u32 2147483647, %v501
  %vm512 = vcmp.eq.f32.partialorder %v511, 8.507059e+37
  %v513 = vand.u32 %v501, 2147483648
  %v514 = vor.u32 1.1754944e-38, %v513
  %v515 = vsel %vm512, %v514, %v510
  %v516 = vmul.f32 1.0, %v515
  %v517 = vxor.u32 %v495, 2147483648
  %v518 = vmul.f32 %v517, 1.442695
  %v519 = vpow.pop %v518
  %v520 = vadd.f32 %v519, 1.0
  %v521 = vrcp.pop %v520
  %v522 = vmul.f32 %v520, %v521
  %v523 = vsub.f32 1.0, %v522
  %v524 = vmul.f32 %v521, %v523
  %v525 = vadd.f32 %v521, %v524
  %vm526 = vweird.f32 %v520
  %vm527 = vweird.f32 %v521
  %vm528 = vmor %vm526, %vm527
  %v529 = vsel %vm528, %v521, %v525
  %v530 = vand.u32 2147483647, %v520
  %vm531 = vcmp.eq.f32.partialorder %v530, 8.507059e+37
  %v532 = vand.u32 %v520, 2147483648
  %v533 = vor.u32 1.1754944e-38, %v532
  %v534 = vsel %vm531, %v533, %v529
  %v535 = vmul.f32 1.0, %v534
  %v536 = vtanh.pop %v496
  %v537 = vxor.u32 %v497, 2147483648
  %v538 = vmul.f32 %v537, 1.442695
  %v539 = vpow.pop %v538
  %v540 = vadd.f32 %v539, 1.0
  %v541 = vrcp.pop %v540
  %v542 = vmul.f32 %v540, %v541
  %v543 = vsub.f32 1.0, %v542
  %v544 = vmul.f32 %v541, %v543
  %v545 = vadd.f32 %v541, %v544
  %vm546 = vweird.f32 %v540
  %vm547 = vweird.f32 %v541
  %vm548 = vmor %vm546, %vm547
  %v549 = vsel %vm548, %v541, %v545
  %v550 = vand.u32 2147483647, %v540
  %vm551 = vcmp.eq.f32.partialorder %v550, 8.507059e+37
  %v552 = vand.u32 %v540, 2147483648
  %v553 = vor.u32 1.1754944e-38, %v552
  %v554 = vsel %vm551, %v553, %v549
  %v555 = vmul.f32 1.0, %v554
  %v556 = vmul.f32 %v535, %v409
  %v557 = vmul.f32 %v516, %v536
  %v558 = vadd.f32 %v556, %v557
  %v559 = vtanh.pop %v558
  %v560 = vmul.f32 %v555, %v559
  %561 = vst [vmem:[%s6] sm:$0xff] %v560
  %s562 = scalar_lea.vmem [#allocation2], 32
  %v563 = vld [vmem:[%s562] sm:$0xff]
  %v564 = vld [vmem:[%s562 + $0x8] sm:$0xff]
  %v565 = vld [vmem:[%s562 + $0x10] sm:$0xff]
  %v566 = vld [vmem:[%s562 + $0x18] sm:$0xff]
  %567 = vmatpush.msra.mxu0 %v158
  %568 = vmatpush.msra.mxu0 %v154
  %569 = vmatpush.msra.mxu0 %v150
  %570 = vmatpush.msra.mxu0 %v146
  %571 = vmatpush.msra.mxu0 %v142
  %572 = vmatpush.msra.mxu0 %v138
  %573 = vmatpush.msra.mxu0 %v134
  %574 = vmatpush.msra.mxu0 %v130
  %575 = vmatpush.msra.mxu0 %v126
  %576 = vmatpush.msra.mxu0 %v122
  %577 = vmatpush.msra.mxu0 %v118
  %578 = vmatpush.msra.mxu0 %v114
  %579 = vmatpush.msra.mxu0 %v110
  %580 = vmatpush.msra.mxu0 %v106
  %581 = vmatpush.msra.mxu0 %v102
  %582 = vmatpush.msra.mxu0 %v98
  %583 = vmatmul.f32.gmra.mxu0 %v560
  %v584 = vpop.f32.mrf.mxu0
  %v585 = vadd.f32 0.0, %v584
  %586 = vdwg.mxu0
  %587 = vmatpush.msra.mxu0 %v159
  %588 = vmatpush.msra.mxu0 %v155
  %589 = vmatpush.msra.mxu0 %v151
  %590 = vmatpush.msra.mxu0 %v147
  %591 = vmatpush.msra.mxu0 %v143
  %592 = vmatpush.msra.mxu0 %v139
  %593 = vmatpush.msra.mxu0 %v135
  %594 = vmatpush.msra.mxu0 %v131
  %595 = vmatpush.msra.mxu0 %v127
  %596 = vmatpush.msra.mxu0 %v123
  %597 = vmatpush.msra.mxu0 %v119
  %598 = vmatpush.msra.mxu0 %v115
  %599 = vmatpush.msra.mxu0 %v111
  %600 = vmatpush.msra.mxu0 %v107
  %601 = vmatpush.msra.mxu0 %v103
  %602 = vmatpush.msra.mxu0 %v99
  %603 = vmatmul.f32.gmra.mxu0 %v560
  %v604 = vpop.f32.mrf.mxu0
  %v605 = vadd.f32 0.0, %v604
  %606 = vdwg.mxu0
  %607 = vmatpush.msra.mxu0 %v160
  %608 = vmatpush.msra.mxu0 %v156
  %609 = vmatpush.msra.mxu0 %v152
  %610 = vmatpush.msra.mxu0 %v148
  %611 = vmatpush.msra.mxu0 %v144
  %612 = vmatpush.msra.mxu0 %v140
  %613 = vmatpush.msra.mxu0 %v136
  %614 = vmatpush.msra.mxu0 %v132
  %615 = vmatpush.msra.mxu0 %v128
  %616 = vmatpush.msra.mxu0 %v124
  %617 = vmatpush.msra.mxu0 %v120
  %618 = vmatpush.msra.mxu0 %v116
  %619 = vmatpush.msra.mxu0 %v112
  %620 = vmatpush.msra.mxu0 %v108
  %621 = vmatpush.msra.mxu0 %v104
  %622 = vmatpush.msra.mxu0 %v100
  %623 = vmatmul.f32.gmra.mxu0 %v560
  %v624 = vpop.f32.mrf.mxu0
  %v625 = vadd.f32 0.0, %v624
  %626 = vdwg.mxu0
  %627 = vmatpush.msra.mxu0 %v161
  %628 = vmatpush.msra.mxu0 %v157
  %629 = vmatpush.msra.mxu0 %v153
  %630 = vmatpush.msra.mxu0 %v149
  %631 = vmatpush.msra.mxu0 %v145
  %632 = vmatpush.msra.mxu0 %v141
  %633 = vmatpush.msra.mxu0 %v137
  %634 = vmatpush.msra.mxu0 %v133
  %635 = vmatpush.msra.mxu0 %v129
  %636 = vmatpush.msra.mxu0 %v125
  %637 = vmatpush.msra.mxu0 %v121
  %638 = vmatpush.msra.mxu0 %v117
  %639 = vmatpush.msra.mxu0 %v113
  %640 = vmatpush.msra.mxu0 %v109
  %641 = vmatpush.msra.mxu0 %v105
  %642 = vmatpush.msra.mxu0 %v101
  %643 = vmatmul.f32.gmra.mxu0 %v560
  %v644 = vpop.f32.mrf.mxu0
  %v645 = vadd.f32 0.0, %v644
  %646 = vdwg.mxu0
  %v647 = vadd.f32 %v563, %v585
  %v648 = vadd.f32 %v564, %v605
  %v649 = vadd.f32 %v565, %v625
  %v650 = vadd.f32 %v566, %v645
  %v651 = vxor.u32 %v647, 2147483648
  %v652 = vmul.f32 %v651, 1.442695
  %v653 = vpow.pop %v652
  %v654 = vadd.f32 %v653, 1.0
  %v655 = vrcp.pop %v654
  %v656 = vmul.f32 %v654, %v655
  %v657 = vsub.f32 1.0, %v656
  %v658 = vmul.f32 %v655, %v657
  %v659 = vadd.f32 %v655, %v658
  %vm660 = vweird.f32 %v654
  %vm661 = vweird.f32 %v655
  %vm662 = vmor %vm660, %vm661
  %v663 = vsel %vm662, %v655, %v659
  %v664 = vand.u32 2147483647, %v654
  %vm665 = vcmp.eq.f32.partialorder %v664, 8.507059e+37
  %v666 = vand.u32 %v654, 2147483648
  %v667 = vor.u32 1.1754944e-38, %v666
  %v668 = vsel %vm665, %v667, %v663
  %v669 = vmul.f32 1.0, %v668
  %v670 = vxor.u32 %v648, 2147483648
  %v671 = vmul.f32 %v670, 1.442695
  %v672 = vpow.pop %v671
  %v673 = vadd.f32 %v672, 1.0
  %v674 = vrcp.pop %v673
  %v675 = vmul.f32 %v673, %v674
  %v676 = vsub.f32 1.0, %v675
  %v677 = vmul.f32 %v674, %v676
  %v678 = vadd.f32 %v674, %v677
  %vm679 = vweird.f32 %v673
  %vm680 = vweird.f32 %v674
  %vm681 = vmor %vm679, %vm680
  %v682 = vsel %vm681, %v674, %v678
  %v683 = vand.u32 2147483647, %v673
  %vm684 = vcmp.eq.f32.partialorder %v683, 8.507059e+37
  %v685 = vand.u32 %v673, 2147483648
  %v686 = vor.u32 1.1754944e-38, %v685
  %v687 = vsel %vm684, %v686, %v682
  %v688 = vmul.f32 1.0, %v687
  %v689 = vtanh.pop %v649
  %v690 = vxor.u32 %v650, 2147483648
  %v691 = vmul.f32 %v690, 1.442695
  %v692 = vpow.pop %v691
  %v693 = vadd.f32 %v692, 1.0
  %v694 = vrcp.pop %v693
  %v695 = vmul.f32 %v693, %v694
  %v696 = vsub.f32 1.0, %v695
  %v697 = vmul.f32 %v694, %v696
  %v698 = vadd.f32 %v694, %v697
  %vm699 = vweird.f32 %v693
  %vm700 = vweird.f32 %v694
  %vm701 = vmor %vm699, %vm700
  %v702 = vsel %vm701, %v694, %v698
  %v703 = vand.u32 2147483647, %v693
  %vm704 = vcmp.eq.f32.partialorder %v703, 8.507059e+37
  %v705 = vand.u32 %v693, 2147483648
  %v706 = vor.u32 1.1754944e-38, %v705
  %v707 = vsel %vm704, %v706, %v702
  %v708 = vmul.f32 1.0, %v707
  %v709 = vmul.f32 %v688, %v558
  %v710 = vmul.f32 %v669, %v689
  %v711 = vadd.f32 %v709, %v710
  %v712 = vtanh.pop %v711
  %v713 = vmul.f32 %v708, %v712
  %s714 = scalar_lea.vmem %s6, 8
  %715 = vst [vmem:[%s714] sm:$0xff] %v713
  %s716 = scalar_lea.vmem [#allocation2], 64
  %v717 = vld [vmem:[%s716] sm:$0xff]
  %v718 = vld [vmem:[%s716 + $0x8] sm:$0xff]
  %v719 = vld [vmem:[%s716 + $0x10] sm:$0xff]
  %v720 = vld [vmem:[%s716 + $0x18] sm:$0xff]
  %721 = vmatpush.msra.mxu0 %v158
  %722 = vmatpush.msra.mxu0 %v154
  %723 = vmatpush.msra.mxu0 %v150
  %724 = vmatpush.msra.mxu0 %v146
  %725 = vmatpush.msra.mxu0 %v142
  %726 = vmatpush.msra.mxu0 %v138
  %727 = vmatpush.msra.mxu0 %v134
  %728 = vmatpush.msra.mxu0 %v130
  %729 = vmatpush.msra.mxu0 %v126
  %730 = vmatpush.msra.mxu0 %v122
  %731 = vmatpush.msra.mxu0 %v118
  %732 = vmatpush.msra.mxu0 %v114
  %733 = vmatpush.msra.mxu0 %v110
  %734 = vmatpush.msra.mxu0 %v106
  %735 = vmatpush.msra.mxu0 %v102
  %736 = vmatpush.msra.mxu0 %v98
  %737 = vmatmul.f32.gmra.mxu0 %v713
  %v738 = vpop.f32.mrf.mxu0
  %v739 = vadd.f32 0.0, %v738
  %740 = vdwg.mxu0
  %741 = vmatpush.msra.mxu0 %v159
  %742 = vmatpush.msra.mxu0 %v155
  %743 = vmatpush.msra.mxu0 %v151
  %744 = vmatpush.msra.mxu0 %v147
  %745 = vmatpush.msra.mxu0 %v143
  %746 = vmatpush.msra.mxu0 %v139
  %747 = vmatpush.msra.mxu0 %v135
  %748 = vmatpush.msra.mxu0 %v131
  %749 = vmatpush.msra.mxu0 %v127
  %750 = vmatpush.msra.mxu0 %v123
  %751 = vmatpush.msra.mxu0 %v119
  %752 = vmatpush.msra.mxu0 %v115
  %753 = vmatpush.msra.mxu0 %v111
  %754 = vmatpush.msra.mxu0 %v107
  %755 = vmatpush.msra.mxu0 %v103
  %756 = vmatpush.msra.mxu0 %v99
  %757 = vmatmul.f32.gmra.mxu0 %v713
  %v758 = vpop.f32.mrf.mxu0
  %v759 = vadd.f32 0.0, %v758
  %760 = vdwg.mxu0
  %761 = vmatpush.msra.mxu0 %v160
  %762 = vmatpush.msra.mxu0 %v156
  %763 = vmatpush.msra.mxu0 %v152
  %764 = vmatpush.msra.mxu0 %v148
  %765 = vmatpush.msra.mxu0 %v144
  %766 = vmatpush.msra.mxu0 %v140
  %767 = vmatpush.msra.mxu0 %v136
  %768 = vmatpush.msra.mxu0 %v132
  %769 = vmatpush.msra.mxu0 %v128
  %770 = vmatpush.msra.mxu0 %v124
  %771 = vmatpush.msra.mxu0 %v120
  %772 = vmatpush.msra.mxu0 %v116
  %773 = vmatpush.msra.mxu0 %v112
  %774 = vmatpush.msra.mxu0 %v108
  %775 = vmatpush.msra.mxu0 %v104
  %776 = vmatpush.msra.mxu0 %v100
  %777 = vmatmul.f32.gmra.mxu0 %v713
  %v778 = vpop.f32.mrf.mxu0
  %v779 = vadd.f32 0.0, %v778
  %780 = vdwg.mxu0
  %781 = vmatpush.msra.mxu0 %v161
  %782 = vmatpush.msra.mxu0 %v157
  %783 = vmatpush.msra.mxu0 %v153
  %784 = vmatpush.msra.mxu0 %v149
  %785 = vmatpush.msra.mxu0 %v145
  %786 = vmatpush.msra.mxu0 %v141
  %787 = vmatpush.msra.mxu0 %v137
  %788 = vmatpush.msra.mxu0 %v133
  %789 = vmatpush.msra.mxu0 %v129
  %790 = vmatpush.msra.mxu0 %v125
  %791 = vmatpush.msra.mxu0 %v121
  %792 = vmatpush.msra.mxu0 %v117
  %793 = vmatpush.msra.mxu0 %v113
  %794 = vmatpush.msra.mxu0 %v109
  %795 = vmatpush.msra.mxu0 %v105
  %796 = vmatpush.msra.mxu0 %v101
  %797 = vmatmul.f32.gmra.mxu0 %v713
  %v798 = vpop.f32.mrf.mxu0
  %v799 = vadd.f32 0.0, %v798
  %800 = vdwg.mxu0
  %v801 = vadd.f32 %v717, %v739
  %v802 = vadd.f32 %v718, %v759
  %v803 = vadd.f32 %v719, %v779
  %v804 = vadd.f32 %v720, %v799
  %v805 = vxor.u32 %v801, 2147483648
  %v806 = vmul.f32 %v805, 1.442695
  %v807 = vpow.pop %v806
  %v808 = vadd.f32 %v807, 1.0
  %v809 = vrcp.pop %v808
  %v810 = vmul.f32 %v808, %v809
  %v811 = vsub.f32 1.0, %v810
  %v812 = vmul.f32 %v809, %v811
  %v813 = vadd.f32 %v809, %v812
  %vm814 = vweird.f32 %v808
  %vm815 = vweird.f32 %v809
  %vm816 = vmor %vm814, %vm815
  %v817 = vsel %vm816, %v809, %v813
  %v818 = vand.u32 2147483647, %v808
  %vm819 = vcmp.eq.f32.partialorder %v818, 8.507059e+37
  %v820 = vand.u32 %v808, 2147483648
  %v821 = vor.u32 1.1754944e-38, %v820
  %v822 = vsel %vm819, %v821, %v817
  %v823 = vmul.f32 1.0, %v822
  %v824 = vxor.u32 %v802, 2147483648
  %v825 = vmul.f32 %v824, 1.442695
  %v826 = vpow.pop %v825
  %v827 = vadd.f32 %v826, 1.0
  %v828 = vrcp.pop %v827
  %v829 = vmul.f32 %v827, %v828
  %v830 = vsub.f32 1.0, %v829
  %v831 = vmul.f32 %v828, %v830
  %v832 = vadd.f32 %v828, %v831
  %vm833 = vweird.f32 %v827
  %vm834 = vweird.f32 %v828
  %vm835 = vmor %vm833, %vm834
  %v836 = vsel %vm835, %v828, %v832
  %v837 = vand.u32 2147483647, %v827
  %vm838 = vcmp.eq.f32.partialorder %v837, 8.507059e+37
  %v839 = vand.u32 %v827, 2147483648
  %v840 = vor.u32 1.1754944e-38, %v839
  %v841 = vsel %vm838, %v840, %v836
  %v842 = vmul.f32 1.0, %v841
  %v843 = vtanh.pop %v803
  %v844 = vxor.u32 %v804, 2147483648
  %v845 = vmul.f32 %v844, 1.442695
  %v846 = vpow.pop %v845
  %v847 = vadd.f32 %v846, 1.0
  %v848 = vrcp.pop %v847
  %v849 = vmul.f32 %v847, %v848
  %v850 = vsub.f32 1.0, %v849
  %v851 = vmul.f32 %v848, %v850
  %v852 = vadd.f32 %v848, %v851
  %vm853 = vweird.f32 %v847
  %vm854 = vweird.f32 %v848
  %vm855 = vmor %vm853, %vm854
  %v856 = vsel %vm855, %v848, %v852
  %v857 = vand.u32 2147483647, %v847
  %vm858 = vcmp.eq.f32.partialorder %v857, 8.507059e+37
  %v859 = vand.u32 %v847, 2147483648
  %v860 = vor.u32 1.1754944e-38, %v859
  %v861 = vsel %vm858, %v860, %v856
  %v862 = vmul.f32 1.0, %v861
  %v863 = vmul.f32 %v842, %v711
  %v864 = vmul.f32 %v823, %v843
  %v865 = vadd.f32 %v863, %v864
  %v866 = vtanh.pop %v865
  %v867 = vmul.f32 %v862, %v866
  %s868 = scalar_lea.vmem %s6, 16
  %869 = vst [vmem:[%s868] sm:$0xff] %v867
  %s870 = scalar_lea.vmem [#allocation2], 96
  %v871 = vld [vmem:[%s870] sm:$0xff]
  %v872 = vld [vmem:[%s870 + $0x8] sm:$0xff]
  %v873 = vld [vmem:[%s870 + $0x10] sm:$0xff]
  %v874 = vld [vmem:[%s870 + $0x18] sm:$0xff]
  %875 = vmatpush.msra.mxu0 %v158
  %876 = vmatpush.msra.mxu0 %v154
  %877 = vmatpush.msra.mxu0 %v150
  %878 = vmatpush.msra.mxu0 %v146
  %879 = vmatpush.msra.mxu0 %v142
  %880 = vmatpush.msra.mxu0 %v138
  %881 = vmatpush.msra.mxu0 %v134
  %882 = vmatpush.msra.mxu0 %v130
  %883 = vmatpush.msra.mxu0 %v126
  %884 = vmatpush.msra.mxu0 %v122
  %885 = vmatpush.msra.mxu0 %v118
  %886 = vmatpush.msra.mxu0 %v114
  %887 = vmatpush.msra.mxu0 %v110
  %888 = vmatpush.msra.mxu0 %v106
  %889 = vmatpush.msra.mxu0 %v102
  %890 = vmatpush.msra.mxu0 %v98
  %891 = vmatmul.f32.gmra.mxu0 %v867
  %v892 = vpop.f32.mrf.mxu0
  %v893 = vadd.f32 0.0, %v892
  %894 = vdwg.mxu0
  %895 = vmatpush.msra.mxu0 %v159
  %896 = vmatpush.msra.mxu0 %v155
  %897 = vmatpush.msra.mxu0 %v151
  %898 = vmatpush.msra.mxu0 %v147
  %899 = vmatpush.msra.mxu0 %v143
  %900 = vmatpush.msra.mxu0 %v139
  %901 = vmatpush.msra.mxu0 %v135
  %902 = vmatpush.msra.mxu0 %v131
  %903 = vmatpush.msra.mxu0 %v127
  %904 = vmatpush.msra.mxu0 %v123
  %905 = vmatpush.msra.mxu0 %v119
  %906 = vmatpush.msra.mxu0 %v115
  %907 = vmatpush.msra.mxu0 %v111
  %908 = vmatpush.msra.mxu0 %v107
  %909 = vmatpush.msra.mxu0 %v103
  %910 = vmatpush.msra.mxu0 %v99
  %911 = vmatmul.f32.gmra.mxu0 %v867
  %v912 = vpop.f32.mrf.mxu0
  %v913 = vadd.f32 0.0, %v912
  %914 = vdwg.mxu0
  %915 = vmatpush.msra.mxu0 %v160
  %916 = vmatpush.msra.mxu0 %v156
  %917 = vmatpush.msra.mxu0 %v152
  %918 = vmatpush.msra.mxu0 %v148
  %919 = vmatpush.msra.mxu0 %v144
  %920 = vmatpush.msra.mxu0 %v140
  %921 = vmatpush.msra.mxu0 %v136
  %922 = vmatpush.msra.mxu0 %v132
  %923 = vmatpush.msra.mxu0 %v128
  %924 = vmatpush.msra.mxu0 %v124
  %925 = vmatpush.msra.mxu0 %v120
  %926 = vmatpush.msra.mxu0 %v116
  %927 = vmatpush.msra.mxu0 %v112
  %928 = vmatpush.msra.mxu0 %v108
  %929 = vmatpush.msra.mxu0 %v104
  %930 = vmatpush.msra.mxu0 %v100
  %931 = vmatmul.f32.gmra.mxu0 %v867
  %v932 = vpop.f32.mrf.mxu0
  %v933 = vadd.f32 0.0, %v932
  %934 = vdwg.mxu0
  %935 = vmatpush.msra.mxu0 %v161
  %936 = vmatpush.msra.mxu0 %v157
  %937 = vmatpush.msra.mxu0 %v153
  %938 = vmatpush.msra.mxu0 %v149
  %939 = vmatpush.msra.mxu0 %v145
  %940 = vmatpush.msra.mxu0 %v141
  %941 = vmatpush.msra.mxu0 %v137
  %942 = vmatpush.msra.mxu0 %v133
  %943 = vmatpush.msra.mxu0 %v129
  %944 = vmatpush.msra.mxu0 %v125
  %945 = vmatpush.msra.mxu0 %v121
  %946 = vmatpush.msra.mxu0 %v117
  %947 = vmatpush.msra.mxu0 %v113
  %948 = vmatpush.msra.mxu0 %v109
  %949 = vmatpush.msra.mxu0 %v105
  %950 = vmatpush.msra.mxu0 %v101
  %951 = vmatmul.f32.gmra.mxu0 %v867
  %v952 = vpop.f32.mrf.mxu0
  %v953 = vadd.f32 0.0, %v952
  %954 = vdwg.mxu0
  %v955 = vadd.f32 %v871, %v893
  %v956 = vadd.f32 %v872, %v913
  %v957 = vadd.f32 %v873, %v933
  %v958 = vadd.f32 %v874, %v953
  %v959 = vxor.u32 %v955, 2147483648
  %v960 = vmul.f32 %v959, 1.442695
  %v961 = vpow.pop %v960
  %v962 = vadd.f32 %v961, 1.0
  %v963 = vrcp.pop %v962
  %v964 = vmul.f32 %v962, %v963
  %v965 = vsub.f32 1.0, %v964
  %v966 = vmul.f32 %v963, %v965
  %v967 = vadd.f32 %v963, %v966
  %vm968 = vweird.f32 %v962
  %vm969 = vweird.f32 %v963
  %vm970 = vmor %vm968, %vm969
  %v971 = vsel %vm970, %v963, %v967
  %v972 = vand.u32 2147483647, %v962
  %vm973 = vcmp.eq.f32.partialorder %v972, 8.507059e+37
  %v974 = vand.u32 %v962, 2147483648
  %v975 = vor.u32 1.1754944e-38, %v974
  %v976 = vsel %vm973, %v975, %v971
  %v977 = vmul.f32 1.0, %v976
  %v978 = vxor.u32 %v956, 2147483648
  %v979 = vmul.f32 %v978, 1.442695
  %v980 = vpow.pop %v979
  %v981 = vadd.f32 %v980, 1.0
  %v982 = vrcp.pop %v981
  %v983 = vmul.f32 %v981, %v982
  %v984 = vsub.f32 1.0, %v983
  %v985 = vmul.f32 %v982, %v984
  %v986 = vadd.f32 %v982, %v985
  %vm987 = vweird.f32 %v981
  %vm988 = vweird.f32 %v982
  %vm989 = vmor %vm987, %vm988
  %v990 = vsel %vm989, %v982, %v986
  %v991 = vand.u32 2147483647, %v981
  %vm992 = vcmp.eq.f32.partialorder %v991, 8.507059e+37
  %v993 = vand.u32 %v981, 2147483648
  %v994 = vor.u32 1.1754944e-38, %v993
  %v995 = vsel %vm992, %v994, %v990
  %v996 = vmul.f32 1.0, %v995
  %v997 = vtanh.pop %v957
  %v998 = vxor.u32 %v958, 2147483648
  %v999 = vmul.f32 %v998, 1.442695
  %v1000 = vpow.pop %v999
  %v1001 = vadd.f32 %v1000, 1.0
  %v1002 = vrcp.pop %v1001
  %v1003 = vmul.f32 %v1001, %v1002
  %v1004 = vsub.f32 1.0, %v1003
  %v1005 = vmul.f32 %v1002, %v1004
  %v1006 = vadd.f32 %v1002, %v1005
  %vm1007 = vweird.f32 %v1001
  %vm1008 = vweird.f32 %v1002
  %vm1009 = vmor %vm1007, %vm1008
  %v1010 = vsel %vm1009, %v1002, %v1006
  %v1011 = vand.u32 2147483647, %v1001
  %vm1012 = vcmp.eq.f32.partialorder %v1011, 8.507059e+37
  %v1013 = vand.u32 %v1001, 2147483648
  %v1014 = vor.u32 1.1754944e-38, %v1013
  %v1015 = vsel %vm1012, %v1014, %v1010
  %v1016 = vmul.f32 1.0, %v1015
  %v1017 = vmul.f32 %v996, %v865
  %v1018 = vmul.f32 %v977, %v997
  %v1019 = vadd.f32 %v1017, %v1018
  %v1020 = vtanh.pop %v1019
  %v1021 = vmul.f32 %v1016, %v1020
  %s1022 = scalar_lea.vmem %s6, 24
  %1023 = vst [vmem:[%s1022] sm:$0xff] %v1021
  %s1024 = scalar_lea.vmem [#allocation2], 128
  %v1025 = vld [vmem:[%s1024] sm:$0xff]
  %v1026 = vld [vmem:[%s1024 + $0x8] sm:$0xff]
  %v1027 = vld [vmem:[%s1024 + $0x10] sm:$0xff]
  %v1028 = vld [vmem:[%s1024 + $0x18] sm:$0xff]
  %1029 = vmatpush.msra.mxu0 %v158
  %1030 = vmatpush.msra.mxu0 %v154
  %1031 = vmatpush.msra.mxu0 %v150
  %1032 = vmatpush.msra.mxu0 %v146
  %1033 = vmatpush.msra.mxu0 %v142
  %1034 = vmatpush.msra.mxu0 %v138
  %1035 = vmatpush.msra.mxu0 %v134
  %1036 = vmatpush.msra.mxu0 %v130
  %1037 = vmatpush.msra.mxu0 %v126
  %1038 = vmatpush.msra.mxu0 %v122
  %1039 = vmatpush.msra.mxu0 %v118
  %1040 = vmatpush.msra.mxu0 %v114
  %1041 = vmatpush.msra.mxu0 %v110
  %1042 = vmatpush.msra.mxu0 %v106
  %1043 = vmatpush.msra.mxu0 %v102
  %1044 = vmatpush.msra.mxu0 %v98
  %1045 = vmatmul.f32.gmra.mxu0 %v1021
  %v1046 = vpop.f32.mrf.mxu0
  %v1047 = vadd.f32 0.0, %v1046
  %1048 = vdwg.mxu0
  %1049 = vmatpush.msra.mxu0 %v159
  %1050 = vmatpush.msra.mxu0 %v155
  %1051 = vmatpush.msra.mxu0 %v151
  %1052 = vmatpush.msra.mxu0 %v147
  %1053 = vmatpush.msra.mxu0 %v143
  %1054 = vmatpush.msra.mxu0 %v139
  %1055 = vmatpush.msra.mxu0 %v135
  %1056 = vmatpush.msra.mxu0 %v131
  %1057 = vmatpush.msra.mxu0 %v127
  %1058 = vmatpush.msra.mxu0 %v123
  %1059 = vmatpush.msra.mxu0 %v119
  %1060 = vmatpush.msra.mxu0 %v115
  %1061 = vmatpush.msra.mxu0 %v111
  %1062 = vmatpush.msra.mxu0 %v107
  %1063 = vmatpush.msra.mxu0 %v103
  %1064 = vmatpush.msra.mxu0 %v99
  %1065 = vmatmul.f32.gmra.mxu0 %v1021
  %v1066 = vpop.f32.mrf.mxu0
  %v1067 = vadd.f32 0.0, %v1066
  %1068 = vdwg.mxu0
  %1069 = vmatpush.msra.mxu0 %v160
  %1070 = vmatpush.msra.mxu0 %v156
  %1071 = vmatpush.msra.mxu0 %v152
  %1072 = vmatpush.msra.mxu0 %v148
  %1073 = vmatpush.msra.mxu0 %v144
  %1074 = vmatpush.msra.mxu0 %v140
  %1075 = vmatpush.msra.mxu0 %v136
  %1076 = vmatpush.msra.mxu0 %v132
  %1077 = vmatpush.msra.mxu0 %v128
  %1078 = vmatpush.msra.mxu0 %v124
  %1079 = vmatpush.msra.mxu0 %v120
  %1080 = vmatpush.msra.mxu0 %v116
  %1081 = vmatpush.msra.mxu0 %v112
  %1082 = vmatpush.msra.mxu0 %v108
  %1083 = vmatpush.msra.mxu0 %v104
  %1084 = vmatpush.msra.mxu0 %v100
  %1085 = vmatmul.f32.gmra.mxu0 %v1021
  %v1086 = vpop.f32.mrf.mxu0
  %v1087 = vadd.f32 0.0, %v1086
  %1088 = vdwg.mxu0
  %1089 = vmatpush.msra.mxu0 %v161
  %1090 = vmatpush.msra.mxu0 %v157
  %1091 = vmatpush.msra.mxu0 %v153
  %1092 = vmatpush.msra.mxu0 %v149
  %1093 = vmatpush.msra.mxu0 %v145
  %1094 = vmatpush.msra.mxu0 %v141
  %1095 = vmatpush.msra.mxu0 %v137
  %1096 = vmatpush.msra.mxu0 %v133
  %1097 = vmatpush.msra.mxu0 %v129
  %1098 = vmatpush.msra.mxu0 %v125
  %1099 = vmatpush.msra.mxu0 %v121
  %1100 = vmatpush.msra.mxu0 %v117
  %1101 = vmatpush.msra.mxu0 %v113
  %1102 = vmatpush.msra.mxu0 %v109
  %1103 = vmatpush.msra.mxu0 %v105
  %1104 = vmatpush.msra.mxu0 %v101
  %1105 = vmatmul.f32.gmra.mxu0 %v1021
  %v1106 = vpop.f32.mrf.mxu0
  %v1107 = vadd.f32 0.0, %v1106
  %1108 = vdwg.mxu0
  %v1109 = vadd.f32 %v1025, %v1047
  %v1110 = vadd.f32 %v1026, %v1067
  %v1111 = vadd.f32 %v1027, %v1087
  %v1112 = vadd.f32 %v1028, %v1107
  %v1113 = vxor.u32 %v1109, 2147483648
  %v1114 = vmul.f32 %v1113, 1.442695
  %v1115 = vpow.pop %v1114
  %v1116 = vadd.f32 %v1115, 1.0
  %v1117 = vrcp.pop %v1116
  %v1118 = vmul.f32 %v1116, %v1117
  %v1119 = vsub.f32 1.0, %v1118
  %v1120 = vmul.f32 %v1117, %v1119
  %v1121 = vadd.f32 %v1117, %v1120
  %vm1122 = vweird.f32 %v1116
  %vm1123 = vweird.f32 %v1117
  %vm1124 = vmor %vm1122, %vm1123
  %v1125 = vsel %vm1124, %v1117, %v1121
  %v1126 = vand.u32 2147483647, %v1116
  %vm1127 = vcmp.eq.f32.partialorder %v1126, 8.507059e+37
  %v1128 = vand.u32 %v1116, 2147483648
  %v1129 = vor.u32 1.1754944e-38, %v1128
  %v1130 = vsel %vm1127, %v1129, %v1125
  %v1131 = vmul.f32 1.0, %v1130
  %v1132 = vxor.u32 %v1110, 2147483648
  %v1133 = vmul.f32 %v1132, 1.442695
  %v1134 = vpow.pop %v1133
  %v1135 = vadd.f32 %v1134, 1.0
  %v1136 = vrcp.pop %v1135
  %v1137 = vmul.f32 %v1135, %v1136
  %v1138 = vsub.f32 1.0, %v1137
  %v1139 = vmul.f32 %v1136, %v1138
  %v1140 = vadd.f32 %v1136, %v1139
  %vm1141 = vweird.f32 %v1135
  %vm1142 = vweird.f32 %v1136
  %vm1143 = vmor %vm1141, %vm1142
  %v1144 = vsel %vm1143, %v1136, %v1140
  %v1145 = vand.u32 2147483647, %v1135
  %vm1146 = vcmp.eq.f32.partialorder %v1145, 8.507059e+37
  %v1147 = vand.u32 %v1135, 2147483648
  %v1148 = vor.u32 1.1754944e-38, %v1147
  %v1149 = vsel %vm1146, %v1148, %v1144
  %v1150 = vmul.f32 1.0, %v1149
  %v1151 = vtanh.pop %v1111
  %v1152 = vxor.u32 %v1112, 2147483648
  %v1153 = vmul.f32 %v1152, 1.442695
  %v1154 = vpow.pop %v1153
  %v1155 = vadd.f32 %v1154, 1.0
  %v1156 = vrcp.pop %v1155
  %v1157 = vmul.f32 %v1155, %v1156
  %v1158 = vsub.f32 1.0, %v1157
  %v1159 = vmul.f32 %v1156, %v1158
  %v1160 = vadd.f32 %v1156, %v1159
  %vm1161 = vweird.f32 %v1155
  %vm1162 = vweird.f32 %v1156
  %vm1163 = vmor %vm1161, %vm1162
  %v1164 = vsel %vm1163, %v1156, %v1160
  %v1165 = vand.u32 2147483647, %v1155
  %vm1166 = vcmp.eq.f32.partialorder %v1165, 8.507059e+37
  %v1167 = vand.u32 %v1155, 2147483648
  %v1168 = vor.u32 1.1754944e-38, %v1167
  %v1169 = vsel %vm1166, %v1168, %v1164
  %v1170 = vmul.f32 1.0, %v1169
  %v1171 = vmul.f32 %v1150, %v1019
  %v1172 = vmul.f32 %v1131, %v1151
  %v1173 = vadd.f32 %v1171, %v1172
  %v1174 = vtanh.pop %v1173
  %v1175 = vmul.f32 %v1170, %v1174
  %s1176 = scalar_lea.vmem %s6, 32
  %1177 = vst [vmem:[%s1176] sm:$0xff] %v1175
  %s1178 = scalar_lea.vmem [#allocation2], 160
  %v1179 = vld [vmem:[%s1178] sm:$0xff]
  %v1180 = vld [vmem:[%s1178 + $0x8] sm:$0xff]
  %v1181 = vld [vmem:[%s1178 + $0x10] sm:$0xff]
  %v1182 = vld [vmem:[%s1178 + $0x18] sm:$0xff]
  %1183 = vmatpush.msra.mxu0 %v158
  %1184 = vmatpush.msra.mxu0 %v154
  %1185 = vmatpush.msra.mxu0 %v150
  %1186 = vmatpush.msra.mxu0 %v146
  %1187 = vmatpush.msra.mxu0 %v142
  %1188 = vmatpush.msra.mxu0 %v138
  %1189 = vmatpush.msra.mxu0 %v134
  %1190 = vmatpush.msra.mxu0 %v130
  %1191 = vmatpush.msra.mxu0 %v126
  %1192 = vmatpush.msra.mxu0 %v122
  %1193 = vmatpush.msra.mxu0 %v118
  %1194 = vmatpush.msra.mxu0 %v114
  %1195 = vmatpush.msra.mxu0 %v110
  %1196 = vmatpush.msra.mxu0 %v106
  %1197 = vmatpush.msra.mxu0 %v102
  %1198 = vmatpush.msra.mxu0 %v98
  %1199 = vmatmul.f32.gmra.mxu0 %v1175
  %v1200 = vpop.f32.mrf.mxu0
  %v1201 = vadd.f32 0.0, %v1200
  %1202 = vdwg.mxu0
  %1203 = vmatpush.msra.mxu0 %v159
  %1204 = vmatpush.msra.mxu0 %v155
  %1205 = vmatpush.msra.mxu0 %v151
  %1206 = vmatpush.msra.mxu0 %v147
  %1207 = vmatpush.msra.mxu0 %v143
  %1208 = vmatpush.msra.mxu0 %v139
  %1209 = vmatpush.msra.mxu0 %v135
  %1210 = vmatpush.msra.mxu0 %v131
  %1211 = vmatpush.msra.mxu0 %v127
  %1212 = vmatpush.msra.mxu0 %v123
  %1213 = vmatpush.msra.mxu0 %v119
  %1214 = vmatpush.msra.mxu0 %v115
  %1215 = vmatpush.msra.mxu0 %v111
  %1216 = vmatpush.msra.mxu0 %v107
  %1217 = vmatpush.msra.mxu0 %v103
  %1218 = vmatpush.msra.mxu0 %v99
  %1219 = vmatmul.f32.gmra.mxu0 %v1175
  %v1220 = vpop.f32.mrf.mxu0
  %v1221 = vadd.f32 0.0, %v1220
  %1222 = vdwg.mxu0
  %1223 = vmatpush.msra.mxu0 %v160
  %1224 = vmatpush.msra.mxu0 %v156
  %1225 = vmatpush.msra.mxu0 %v152
  %1226 = vmatpush.msra.mxu0 %v148
  %1227 = vmatpush.msra.mxu0 %v144
  %1228 = vmatpush.msra.mxu0 %v140
  %1229 = vmatpush.msra.mxu0 %v136
  %1230 = vmatpush.msra.mxu0 %v132
  %1231 = vmatpush.msra.mxu0 %v128
  %1232 = vmatpush.msra.mxu0 %v124
  %1233 = vmatpush.msra.mxu0 %v120
  %1234 = vmatpush.msra.mxu0 %v116
  %1235 = vmatpush.msra.mxu0 %v112
  %1236 = vmatpush.msra.mxu0 %v108
  %1237 = vmatpush.msra.mxu0 %v104
  %1238 = vmatpush.msra.mxu0 %v100
  %1239 = vmatmul.f32.gmra.mxu0 %v1175
  %v1240 = vpop.f32.mrf.mxu0
  %v1241 = vadd.f32 0.0, %v1240
  %1242 = vdwg.mxu0
  %1243 = vmatpush.msra.mxu0 %v161
  %1244 = vmatpush.msra.mxu0 %v157
  %1245 = vmatpush.msra.mxu0 %v153
  %1246 = vmatpush.msra.mxu0 %v149
  %1247 = vmatpush.msra.mxu0 %v145
  %1248 = vmatpush.msra.mxu0 %v141
  %1249 = vmatpush.msra.mxu0 %v137
  %1250 = vmatpush.msra.mxu0 %v133
  %1251 = vmatpush.msra.mxu0 %v129
  %1252 = vmatpush.msra.mxu0 %v125
  %1253 = vmatpush.msra.mxu0 %v121
  %1254 = vmatpush.msra.mxu0 %v117
  %1255 = vmatpush.msra.mxu0 %v113
  %1256 = vmatpush.msra.mxu0 %v109
  %1257 = vmatpush.msra.mxu0 %v105
  %1258 = vmatpush.msra.mxu0 %v101
  %1259 = vmatmul.f32.gmra.mxu0 %v1175
  %v1260 = vpop.f32.mrf.mxu0
  %v1261 = vadd.f32 0.0, %v1260
  %1262 = vdwg.mxu0
  %v1263 = vadd.f32 %v1179, %v1201
  %v1264 = vadd.f32 %v1180, %v1221
  %v1265 = vadd.f32 %v1181, %v1241
  %v1266 = vadd.f32 %v1182, %v1261
  %v1267 = vxor.u32 %v1263, 2147483648
  %v1268 = vmul.f32 %v1267, 1.442695
  %v1269 = vpow.pop %v1268
  %v1270 = vadd.f32 %v1269, 1.0
  %v1271 = vrcp.pop %v1270
  %v1272 = vmul.f32 %v1270, %v1271
  %v1273 = vsub.f32 1.0, %v1272
  %v1274 = vmul.f32 %v1271, %v1273
  %v1275 = vadd.f32 %v1271, %v1274
  %vm1276 = vweird.f32 %v1270
  %vm1277 = vweird.f32 %v1271
  %vm1278 = vmor %vm1276, %vm1277
  %v1279 = vsel %vm1278, %v1271, %v1275
  %v1280 = vand.u32 2147483647, %v1270
  %vm1281 = vcmp.eq.f32.partialorder %v1280, 8.507059e+37
  %v1282 = vand.u32 %v1270, 2147483648
  %v1283 = vor.u32 1.1754944e-38, %v1282
  %v1284 = vsel %vm1281, %v1283, %v1279
  %v1285 = vmul.f32 1.0, %v1284
  %v1286 = vxor.u32 %v1264, 2147483648
  %v1287 = vmul.f32 %v1286, 1.442695
  %v1288 = vpow.pop %v1287
  %v1289 = vadd.f32 %v1288, 1.0
  %v1290 = vrcp.pop %v1289
  %v1291 = vmul.f32 %v1289, %v1290
  %v1292 = vsub.f32 1.0, %v1291
  %v1293 = vmul.f32 %v1290, %v1292
  %v1294 = vadd.f32 %v1290, %v1293
  %vm1295 = vweird.f32 %v1289
  %vm1296 = vweird.f32 %v1290
  %vm1297 = vmor %vm1295, %vm1296
  %v1298 = vsel %vm1297, %v1290, %v1294
  %v1299 = vand.u32 2147483647, %v1289
  %vm1300 = vcmp.eq.f32.partialorder %v1299, 8.507059e+37
  %v1301 = vand.u32 %v1289, 2147483648
  %v1302 = vor.u32 1.1754944e-38, %v1301
  %v1303 = vsel %vm1300, %v1302, %v1298
  %v1304 = vmul.f32 1.0, %v1303
  %v1305 = vtanh.pop %v1265
  %v1306 = vxor.u32 %v1266, 2147483648
  %v1307 = vmul.f32 %v1306, 1.442695
  %v1308 = vpow.pop %v1307
  %v1309 = vadd.f32 %v1308, 1.0
  %v1310 = vrcp.pop %v1309
  %v1311 = vmul.f32 %v1309, %v1310
  %v1312 = vsub.f32 1.0, %v1311
  %v1313 = vmul.f32 %v1310, %v1312
  %v1314 = vadd.f32 %v1310, %v1313
  %vm1315 = vweird.f32 %v1309
  %vm1316 = vweird.f32 %v1310
  %vm1317 = vmor %vm1315, %vm1316
  %v1318 = vsel %vm1317, %v1310, %v1314
  %v1319 = vand.u32 2147483647, %v1309
  %vm1320 = vcmp.eq.f32.partialorder %v1319, 8.507059e+37
  %v1321 = vand.u32 %v1309, 2147483648
  %v1322 = vor.u32 1.1754944e-38, %v1321
  %v1323 = vsel %vm1320, %v1322, %v1318
  %v1324 = vmul.f32 1.0, %v1323
  %v1325 = vmul.f32 %v1304, %v1173
  %v1326 = vmul.f32 %v1285, %v1305
  %v1327 = vadd.f32 %v1325, %v1326
  %v1328 = vtanh.pop %v1327
  %v1329 = vmul.f32 %v1324, %v1328
  %s1330 = scalar_lea.vmem %s6, 40
  %1331 = vst [vmem:[%s1330] sm:$0xff] %v1329
  %s1332 = scalar_lea.vmem [#allocation2], 192
  %v1333 = vld [vmem:[%s1332] sm:$0xff]
  %v1334 = vld [vmem:[%s1332 + $0x8] sm:$0xff]
  %v1335 = vld [vmem:[%s1332 + $0x10] sm:$0xff]
  %v1336 = vld [vmem:[%s1332 + $0x18] sm:$0xff]
  %1337 = vmatpush.msra.mxu0 %v158
  %1338 = vmatpush.msra.mxu0 %v154
  %1339 = vmatpush.msra.mxu0 %v150
  %1340 = vmatpush.msra.mxu0 %v146
  %1341 = vmatpush.msra.mxu0 %v142
  %1342 = vmatpush.msra.mxu0 %v138
  %1343 = vmatpush.msra.mxu0 %v134
  %1344 = vmatpush.msra.mxu0 %v130
  %1345 = vmatpush.msra.mxu0 %v126
  %1346 = vmatpush.msra.mxu0 %v122
  %1347 = vmatpush.msra.mxu0 %v118
  %1348 = vmatpush.msra.mxu0 %v114
  %1349 = vmatpush.msra.mxu0 %v110
  %1350 = vmatpush.msra.mxu0 %v106
  %1351 = vmatpush.msra.mxu0 %v102
  %1352 = vmatpush.msra.mxu0 %v98
  %1353 = vmatmul.f32.gmra.mxu0 %v1329
  %v1354 = vpop.f32.mrf.mxu0
  %v1355 = vadd.f32 0.0, %v1354
  %1356 = vdwg.mxu0
  %1357 = vmatpush.msra.mxu0 %v159
  %1358 = vmatpush.msra.mxu0 %v155
  %1359 = vmatpush.msra.mxu0 %v151
  %1360 = vmatpush.msra.mxu0 %v147
  %1361 = vmatpush.msra.mxu0 %v143
  %1362 = vmatpush.msra.mxu0 %v139
  %1363 = vmatpush.msra.mxu0 %v135
  %1364 = vmatpush.msra.mxu0 %v131
  %1365 = vmatpush.msra.mxu0 %v127
  %1366 = vmatpush.msra.mxu0 %v123
  %1367 = vmatpush.msra.mxu0 %v119
  %1368 = vmatpush.msra.mxu0 %v115
  %1369 = vmatpush.msra.mxu0 %v111
  %1370 = vmatpush.msra.mxu0 %v107
  %1371 = vmatpush.msra.mxu0 %v103
  %1372 = vmatpush.msra.mxu0 %v99
  %1373 = vmatmul.f32.gmra.mxu0 %v1329
  %v1374 = vpop.f32.mrf.mxu0
  %v1375 = vadd.f32 0.0, %v1374
  %1376 = vdwg.mxu0
  %1377 = vmatpush.msra.mxu0 %v160
  %1378 = vmatpush.msra.mxu0 %v156
  %1379 = vmatpush.msra.mxu0 %v152
  %1380 = vmatpush.msra.mxu0 %v148
  %1381 = vmatpush.msra.mxu0 %v144
  %1382 = vmatpush.msra.mxu0 %v140
  %1383 = vmatpush.msra.mxu0 %v136
  %1384 = vmatpush.msra.mxu0 %v132
  %1385 = vmatpush.msra.mxu0 %v128
  %1386 = vmatpush.msra.mxu0 %v124
  %1387 = vmatpush.msra.mxu0 %v120
  %1388 = vmatpush.msra.mxu0 %v116
  %1389 = vmatpush.msra.mxu0 %v112
  %1390 = vmatpush.msra.mxu0 %v108
  %1391 = vmatpush.msra.mxu0 %v104
  %1392 = vmatpush.msra.mxu0 %v100
  %1393 = vmatmul.f32.gmra.mxu0 %v1329
  %v1394 = vpop.f32.mrf.mxu0
  %v1395 = vadd.f32 0.0, %v1394
  %1396 = vdwg.mxu0
  %1397 = vmatpush.msra.mxu0 %v161
  %1398 = vmatpush.msra.mxu0 %v157
  %1399 = vmatpush.msra.mxu0 %v153
  %1400 = vmatpush.msra.mxu0 %v149
  %1401 = vmatpush.msra.mxu0 %v145
  %1402 = vmatpush.msra.mxu0 %v141
  %1403 = vmatpush.msra.mxu0 %v137
  %1404 = vmatpush.msra.mxu0 %v133
  %1405 = vmatpush.msra.mxu0 %v129
  %1406 = vmatpush.msra.mxu0 %v125
  %1407 = vmatpush.msra.mxu0 %v121
  %1408 = vmatpush.msra.mxu0 %v117
  %1409 = vmatpush.msra.mxu0 %v113
  %1410 = vmatpush.msra.mxu0 %v109
  %1411 = vmatpush.msra.mxu0 %v105
  %1412 = vmatpush.msra.mxu0 %v101
  %1413 = vmatmul.f32.gmra.mxu0 %v1329
  %v1414 = vpop.f32.mrf.mxu0
  %v1415 = vadd.f32 0.0, %v1414
  %1416 = vdwg.mxu0
  %v1417 = vadd.f32 %v1333, %v1355
  %v1418 = vadd.f32 %v1334, %v1375
  %v1419 = vadd.f32 %v1335, %v1395
  %v1420 = vadd.f32 %v1336, %v1415
  %v1421 = vxor.u32 %v1417, 2147483648
  %v1422 = vmul.f32 %v1421, 1.442695
  %v1423 = vpow.pop %v1422
  %v1424 = vadd.f32 %v1423, 1.0
  %v1425 = vrcp.pop %v1424
  %v1426 = vmul.f32 %v1424, %v1425
  %v1427 = vsub.f32 1.0, %v1426
  %v1428 = vmul.f32 %v1425, %v1427
  %v1429 = vadd.f32 %v1425, %v1428
  %vm1430 = vweird.f32 %v1424
  %vm1431 = vweird.f32 %v1425
  %vm1432 = vmor %vm1430, %vm1431
  %v1433 = vsel %vm1432, %v1425, %v1429
  %v1434 = vand.u32 2147483647, %v1424
  %vm1435 = vcmp.eq.f32.partialorder %v1434, 8.507059e+37
  %v1436 = vand.u32 %v1424, 2147483648
  %v1437 = vor.u32 1.1754944e-38, %v1436
  %v1438 = vsel %vm1435, %v1437, %v1433
  %v1439 = vmul.f32 1.0, %v1438
  %v1440 = vxor.u32 %v1418, 2147483648
  %v1441 = vmul.f32 %v1440, 1.442695
  %v1442 = vpow.pop %v1441
  %v1443 = vadd.f32 %v1442, 1.0
  %v1444 = vrcp.pop %v1443
  %v1445 = vmul.f32 %v1443, %v1444
  %v1446 = vsub.f32 1.0, %v1445
  %v1447 = vmul.f32 %v1444, %v1446
  %v1448 = vadd.f32 %v1444, %v1447
  %vm1449 = vweird.f32 %v1443
  %vm1450 = vweird.f32 %v1444
  %vm1451 = vmor %vm1449, %vm1450
  %v1452 = vsel %vm1451, %v1444, %v1448
  %v1453 = vand.u32 2147483647, %v1443
  %vm1454 = vcmp.eq.f32.partialorder %v1453, 8.507059e+37
  %v1455 = vand.u32 %v1443, 2147483648
  %v1456 = vor.u32 1.1754944e-38, %v1455
  %v1457 = vsel %vm1454, %v1456, %v1452
  %v1458 = vmul.f32 1.0, %v1457
  %v1459 = vtanh.pop %v1419
  %v1460 = vxor.u32 %v1420, 2147483648
  %v1461 = vmul.f32 %v1460, 1.442695
  %v1462 = vpow.pop %v1461
  %v1463 = vadd.f32 %v1462, 1.0
  %v1464 = vrcp.pop %v1463
  %v1465 = vmul.f32 %v1463, %v1464
  %v1466 = vsub.f32 1.0, %v1465
  %v1467 = vmul.f32 %v1464, %v1466
  %v1468 = vadd.f32 %v1464, %v1467
  %vm1469 = vweird.f32 %v1463
  %vm1470 = vweird.f32 %v1464
  %vm1471 = vmor %vm1469, %vm1470
  %v1472 = vsel %vm1471, %v1464, %v1468
  %v1473 = vand.u32 2147483647, %v1463
  %vm1474 = vcmp.eq.f32.partialorder %v1473, 8.507059e+37
  %v1475 = vand.u32 %v1463, 2147483648
  %v1476 = vor.u32 1.1754944e-38, %v1475
  %v1477 = vsel %vm1474, %v1476, %v1472
  %v1478 = vmul.f32 1.0, %v1477
  %v1479 = vmul.f32 %v1458, %v1327
  %v1480 = vmul.f32 %v1439, %v1459
  %v1481 = vadd.f32 %v1479, %v1480
  %v1482 = vtanh.pop %v1481
  %v1483 = vmul.f32 %v1478, %v1482
  %s1484 = scalar_lea.vmem %s6, 48
  %1485 = vst [vmem:[%s1484] sm:$0xff] %v1483
  %s1486 = scalar_lea.vmem [#allocation2], 224
  %v1487 = vld [vmem:[%s1486] sm:$0xff]
  %v1488 = vld [vmem:[%s1486 + $0x8] sm:$0xff]
  %v1489 = vld [vmem:[%s1486 + $0x10] sm:$0xff]
  %v1490 = vld [vmem:[%s1486 + $0x18] sm:$0xff]
  %1491 = vmatpush.msra.mxu0 %v158
  %1492 = vmatpush.msra.mxu0 %v154
  %1493 = vmatpush.msra.mxu0 %v150
  %1494 = vmatpush.msra.mxu0 %v146
  %1495 = vmatpush.msra.mxu0 %v142
  %1496 = vmatpush.msra.mxu0 %v138
  %1497 = vmatpush.msra.mxu0 %v134
  %1498 = vmatpush.msra.mxu0 %v130
  %1499 = vmatpush.msra.mxu0 %v126
  %1500 = vmatpush.msra.mxu0 %v122
  %1501 = vmatpush.msra.mxu0 %v118
  %1502 = vmatpush.msra.mxu0 %v114
  %1503 = vmatpush.msra.mxu0 %v110
  %1504 = vmatpush.msra.mxu0 %v106
  %1505 = vmatpush.msra.mxu0 %v102
  %1506 = vmatpush.msra.mxu0 %v98
  %1507 = vmatmul.f32.gmra.mxu0 %v1483
  %v1508 = vpop.f32.mrf.mxu0
  %v1509 = vadd.f32 0.0, %v1508
  %1510 = vdwg.mxu0
  %1511 = vmatpush.msra.mxu0 %v159
  %1512 = vmatpush.msra.mxu0 %v155
  %1513 = vmatpush.msra.mxu0 %v151
  %1514 = vmatpush.msra.mxu0 %v147
  %1515 = vmatpush.msra.mxu0 %v143
  %1516 = vmatpush.msra.mxu0 %v139
  %1517 = vmatpush.msra.mxu0 %v135
  %1518 = vmatpush.msra.mxu0 %v131
  %1519 = vmatpush.msra.mxu0 %v127
  %1520 = vmatpush.msra.mxu0 %v123
  %1521 = vmatpush.msra.mxu0 %v119
  %1522 = vmatpush.msra.mxu0 %v115
  %1523 = vmatpush.msra.mxu0 %v111
  %1524 = vmatpush.msra.mxu0 %v107
  %1525 = vmatpush.msra.mxu0 %v103
  %1526 = vmatpush.msra.mxu0 %v99
  %1527 = vmatmul.f32.gmra.mxu0 %v1483
  %v1528 = vpop.f32.mrf.mxu0
  %v1529 = vadd.f32 0.0, %v1528
  %1530 = vdwg.mxu0
  %1531 = vmatpush.msra.mxu0 %v160
  %1532 = vmatpush.msra.mxu0 %v156
  %1533 = vmatpush.msra.mxu0 %v152
  %1534 = vmatpush.msra.mxu0 %v148
  %1535 = vmatpush.msra.mxu0 %v144
  %1536 = vmatpush.msra.mxu0 %v140
  %1537 = vmatpush.msra.mxu0 %v136
  %1538 = vmatpush.msra.mxu0 %v132
  %1539 = vmatpush.msra.mxu0 %v128
  %1540 = vmatpush.msra.mxu0 %v124
  %1541 = vmatpush.msra.mxu0 %v120
  %1542 = vmatpush.msra.mxu0 %v116
  %1543 = vmatpush.msra.mxu0 %v112
  %1544 = vmatpush.msra.mxu0 %v108
  %1545 = vmatpush.msra.mxu0 %v104
  %1546 = vmatpush.msra.mxu0 %v100
  %1547 = vmatmul.f32.gmra.mxu0 %v1483
  %v1548 = vpop.f32.mrf.mxu0
  %v1549 = vadd.f32 0.0, %v1548
  %1550 = vdwg.mxu0
  %1551 = vmatpush.msra.mxu0 %v161
  %1552 = vmatpush.msra.mxu0 %v157
  %1553 = vmatpush.msra.mxu0 %v153
  %1554 = vmatpush.msra.mxu0 %v149
  %1555 = vmatpush.msra.mxu0 %v145
  %1556 = vmatpush.msra.mxu0 %v141
  %1557 = vmatpush.msra.mxu0 %v137
  %1558 = vmatpush.msra.mxu0 %v133
  %1559 = vmatpush.msra.mxu0 %v129
  %1560 = vmatpush.msra.mxu0 %v125
  %1561 = vmatpush.msra.mxu0 %v121
  %1562 = vmatpush.msra.mxu0 %v117
  %1563 = vmatpush.msra.mxu0 %v113
  %1564 = vmatpush.msra.mxu0 %v109
  %1565 = vmatpush.msra.mxu0 %v105
  %1566 = vmatpush.msra.mxu0 %v101
  %1567 = vmatmul.f32.gmra.mxu0 %v1483
  %v1568 = vpop.f32.mrf.mxu0
  %v1569 = vadd.f32 0.0, %v1568
  %1570 = vdwg.mxu0
  %v1571 = vadd.f32 %v1487, %v1509
  %v1572 = vadd.f32 %v1488, %v1529
  %v1573 = vadd.f32 %v1489, %v1549
  %v1574 = vadd.f32 %v1490, %v1569
  %v1575 = vxor.u32 %v1571, 2147483648
  %v1576 = vmul.f32 %v1575, 1.442695
  %v1577 = vpow.pop %v1576
  %v1578 = vadd.f32 %v1577, 1.0
  %v1579 = vrcp.pop %v1578
  %v1580 = vmul.f32 %v1578, %v1579
  %v1581 = vsub.f32 1.0, %v1580
  %v1582 = vmul.f32 %v1579, %v1581
  %v1583 = vadd.f32 %v1579, %v1582
  %vm1584 = vweird.f32 %v1578
  %vm1585 = vweird.f32 %v1579
  %vm1586 = vmor %vm1584, %vm1585
  %v1587 = vsel %vm1586, %v1579, %v1583
  %v1588 = vand.u32 2147483647, %v1578
  %vm1589 = vcmp.eq.f32.partialorder %v1588, 8.507059e+37
  %v1590 = vand.u32 %v1578, 2147483648
  %v1591 = vor.u32 1.1754944e-38, %v1590
  %v1592 = vsel %vm1589, %v1591, %v1587
  %v1593 = vmul.f32 1.0, %v1592
  %v1594 = vxor.u32 %v1572, 2147483648
  %v1595 = vmul.f32 %v1594, 1.442695
  %v1596 = vpow.pop %v1595
  %v1597 = vadd.f32 %v1596, 1.0
  %v1598 = vrcp.pop %v1597
  %v1599 = vmul.f32 %v1597, %v1598
  %v1600 = vsub.f32 1.0, %v1599
  %v1601 = vmul.f32 %v1598, %v1600
  %v1602 = vadd.f32 %v1598, %v1601
  %vm1603 = vweird.f32 %v1597
  %vm1604 = vweird.f32 %v1598
  %vm1605 = vmor %vm1603, %vm1604
  %v1606 = vsel %vm1605, %v1598, %v1602
  %v1607 = vand.u32 2147483647, %v1597
  %vm1608 = vcmp.eq.f32.partialorder %v1607, 8.507059e+37
  %v1609 = vand.u32 %v1597, 2147483648
  %v1610 = vor.u32 1.1754944e-38, %v1609
  %v1611 = vsel %vm1608, %v1610, %v1606
  %v1612 = vmul.f32 1.0, %v1611
  %v1613 = vtanh.pop %v1573
  %v1614 = vxor.u32 %v1574, 2147483648
  %v1615 = vmul.f32 %v1614, 1.442695
  %v1616 = vpow.pop %v1615
  %v1617 = vadd.f32 %v1616, 1.0
  %v1618 = vrcp.pop %v1617
  %v1619 = vmul.f32 %v1617, %v1618
  %v1620 = vsub.f32 1.0, %v1619
  %v1621 = vmul.f32 %v1618, %v1620
  %v1622 = vadd.f32 %v1618, %v1621
  %vm1623 = vweird.f32 %v1617
  %vm1624 = vweird.f32 %v1618
  %vm1625 = vmor %vm1623, %vm1624
  %v1626 = vsel %vm1625, %v1618, %v1622
  %v1627 = vand.u32 2147483647, %v1617
  %vm1628 = vcmp.eq.f32.partialorder %v1627, 8.507059e+37
  %v1629 = vand.u32 %v1617, 2147483648
  %v1630 = vor.u32 1.1754944e-38, %v1629
  %v1631 = vsel %vm1628, %v1630, %v1626
  %v1632 = vmul.f32 1.0, %v1631
  %v1633 = vmul.f32 %v1612, %v1481
  %v1634 = vmul.f32 %v1593, %v1613
  %v1635 = vadd.f32 %v1633, %v1634
  %v1636 = vtanh.pop %v1635
  %v1637 = vmul.f32 %v1632, %v1636
  %s1638 = scalar_lea.vmem %s6, 56
  %1639 = vst [vmem:[%s1638] sm:$0xff] %v1637
  %1640 = vst [vmem:[#allocation3] sm:$0xff] %v1637
  %1641 = vst [vmem:[#allocation4] sm:$0xff] %v1635
  // Predicated region
  $region30: #{seq2seq_forward.1} parent=0 // pred_check
    %p1642 = pneg %p26
  $region31: #{seq2seq_forward.1} parent=0 // pred_check_branch
    %1644 = sbr.rel (%p1642) target = $region33
  $region32: #{seq2seq_forward.1} parent=0 // pred_region
    %1645 = vst [vmem:[%s7] sm:$0xff] %v1637
    %1646 = vst [vmem:[%s8] sm:$0xff] %v1635
  $region33: #{seq2seq_forward.1} parent=0 // pred_fallthru
    _
  // Predicated region
  $region34: #{seq2seq_forward.1} parent=0 // pred_check
    _
  $region35: #{seq2seq_forward.1} parent=0 // pred_check_branch
    %1648 = sbr.rel (0) target = $region37
  $region36: #{seq2seq_forward.1} parent=0 // pred_region
    _
  $region37: #{seq2seq_forward.1} parent=0 // pred_fallthru
    _
  // Predicated region
  $region38: #{seq2seq_forward.1} parent=0 // pred_check
    _
  $region39: #{seq2seq_forward.1} parent=0 // pred_check_branch
    %1650 = sbr.rel (0) target = $region41
  $region40: #{seq2seq_forward.1} parent=0 // pred_region
    _
  $region41: #{seq2seq_forward.1} parent=0 // pred_fallthru
    _
  // Predicated region
  $region42: #{seq2seq_forward.1} parent=0 // pred_check
    _
  $region43: #{seq2seq_forward.1} parent=0 // pred_check_branch
    %1652 = sbr.rel (0) target = $region45
  $region44: #{seq2seq_forward.1} parent=0 // pred_region
    _
  $region45: #{seq2seq_forward.1} parent=0 // pred_fallthru
    _
  // Predicated region
  $region46: #{seq2seq_forward.1} parent=0 // pred_check
    _
  $region47: #{seq2seq_forward.1} parent=0 // pred_check_branch
    %1654 = sbr.rel (0) target = $region49
  $region48: #{seq2seq_forward.1} parent=0 // pred_region
    _
  $region49: #{seq2seq_forward.1} parent=0 // pred_fallthru
    _
  // Predicated region
  $region50: #{seq2seq_forward.1} parent=0 // pred_check
    _
  $region51: #{seq2seq_forward.1} parent=0 // pred_check_branch
    %1656 = sbr.rel (0) target = $region53
  $region52: #{seq2seq_forward.1} parent=0 // pred_region
    _
  $region53: #{seq2seq_forward.1} parent=0 // pred_fallthru
    _
  // Predicated region
  $region54: #{seq2seq_forward.1} parent=0 // pred_check
    _
  $region55: #{seq2seq_forward.1} parent=0 // pred_check_branch
    %1658 = sbr.rel (0) target = $region57
  $region56: #{seq2seq_forward.1} parent=0 // pred_region
    _
  $region57: #{seq2seq_forward.1} parent=0 // pred_fallthru
    _

</llo_original>
